<compile_context>
chip_gen: v5e
topology: v5e:2x2
jax: 0.10.0
libtpu: 0.0.40
codegen_flags: <defaults>
</compile_context>

<pallas_src>
import functools

import jax
import jax.numpy as jnp
from jax.experimental import pallas as pl
from jax.experimental.pallas import tpu as pltpu


# -----------------------------------------------------------------------------
# Fused cross-attention kernel
# -----------------------------------------------------------------------------
def _cross_attention_kernel(x_ref, key_ref, val_ref,
                            wq_ref, wk_ref, wv_ref, wo_ref, bo_ref,
                            o_ref, *, heads, dim_head):
    # x_ref:   (1, tq, Dq)      query tokens tile
    # key_ref: (1, M,  Dk)      context tokens (whole)
    # val_ref: (1, M,  Dv)
    # wq/wk/wv: (D*, H*C)   wo: (H*C, Dq)   bo: (1, Dq)
    H, C = heads, dim_head
    scale = C ** (-0.5)
    bf16 = jnp.bfloat16

    xb = x_ref[0].astype(bf16)       # (tq, Dq)
    kb = key_ref[0].astype(bf16)     # (M, Dk)
    vb = val_ref[0].astype(bf16)     # (M, Dv)

    # Q/K/V projections: full-width (HC-lane) MXU passes, bf16 in / f32 out.
    # Scale is folded into q here.
    q = jnp.dot(xb, wq_ref[...].astype(bf16),
                preferred_element_type=jnp.float32) * scale          # (tq, HC)
    k = jnp.dot(kb, wk_ref[...].astype(bf16),
                preferred_element_type=jnp.float32)                   # (M, HC)
    v = jnp.dot(vb, wv_ref[...].astype(bf16),
                preferred_element_type=jnp.float32)                   # (M, HC)

    # Head split (S, H*C) -> (H, S, C).  Static lane slices stacked along a new
    # leading axis; the heavy math below runs batched over that axis.
    def split_heads(t):
        return jnp.stack([t[:, h * C:(h + 1) * C] for h in range(H)], axis=0)

    qh = split_heads(q.astype(bf16))     # (H, tq, C)
    kh = split_heads(k.astype(bf16))     # (H, M, C)
    vh = split_heads(v.astype(bf16))     # (H, M, C)

    # Batched attention over heads (softmax math in f32).
    sim = jnp.einsum('hqc,hkc->hqk', qh, kh,
                     preferred_element_type=jnp.float32)              # (H, tq, M)
    sim = sim - jnp.max(sim, axis=-1, keepdims=True)
    p = jnp.exp(sim)
    attn = p * pl.reciprocal(jnp.sum(p, axis=-1, keepdims=True), approx=True)
    out = jnp.einsum('hqk,hkc->hqc', attn.astype(bf16), vh,
                     preferred_element_type=jnp.float32)              # (H, tq, C)

    # Output projection: accumulate each head's partial product against its row
    # block of wo (no concatenate of heads back to (tq, H*C)).
    acc = jnp.zeros((out.shape[1], o_ref.shape[-1]), jnp.float32)     # (tq, Dq)
    for h in range(H):
        acc = acc + jnp.dot(out[h].astype(bf16),
                            wo_ref[pl.ds(h * C, C), :].astype(bf16),
                            preferred_element_type=jnp.float32)
    o_ref[0] = (acc + bo_ref[...]).astype(o_ref.dtype)


def cross_attention(x, key, value, wq, wk, wv, wo, bo, heads, dim_head,
                    q_block=64):
    """x: (B, N, query_dim); key: (B, M, key_dim); value: (B, M, value_dim)."""
    B, N, Dq = x.shape
    _, M, Dk = key.shape
    Dv = value.shape[-1]
    HC = heads * dim_head

    if N % q_block != 0:
        q_block = N                      # fall back to whole-sequence blocks
    nq = N // q_block

    return pl.pallas_call(
        functools.partial(_cross_attention_kernel, heads=heads, dim_head=dim_head),
        out_shape=jax.ShapeDtypeStruct((B, N, Dq), x.dtype),
        grid=(B, nq),
        in_specs=[
            pl.BlockSpec((1, q_block, Dq), lambda b, i: (b, i, 0)),   # x tile
            pl.BlockSpec((1, M, Dk), lambda b, i: (b, 0, 0)),         # key (whole)
            pl.BlockSpec((1, M, Dv), lambda b, i: (b, 0, 0)),         # value (whole)
            pl.BlockSpec((Dq, HC), lambda b, i: (0, 0)),              # wq
            pl.BlockSpec((Dk, HC), lambda b, i: (0, 0)),              # wk
            pl.BlockSpec((Dv, HC), lambda b, i: (0, 0)),              # wv
            pl.BlockSpec((HC, Dq), lambda b, i: (0, 0)),              # wo
            pl.BlockSpec((1, Dq), lambda b, i: (0, 0)),               # bo
        ],
        out_specs=pl.BlockSpec((1, q_block, Dq), lambda b, i: (b, i, 0)),
        compiler_params=pltpu.CompilerParams(
            dimension_semantics=("parallel", "parallel")),
    )(x, key, value, wq, wk, wv, wo, bo)


# -----------------------------------------------------------------------------
# Pure-JAX reference (matches CrossAttention.forward_plain with mask=None)
# -----------------------------------------------------------------------------
def _reference(x, key, value, wq, wk, wv, wo, bo, heads, dim_head):
    B, N, _ = x.shape
    M = key.shape[1]
    H, C = heads, dim_head
    q = (x @ wq).reshape(B, N, H, C)
    k = (key @ wk).reshape(B, M, H, C)
    v = (value @ wv).reshape(B, M, H, C)
    sim = jnp.einsum('bnhc,bmhc->bhnm', q, k) * (C ** -0.5)
    attn = jax.nn.softmax(sim, axis=-1)
    out = jnp.einsum('bhnm,bmhc->bnhc', attn, v).reshape(B, N, H * C)
    return out @ wo + bo[0]


# -----------------------------------------------------------------------------
# Deterministic test
# -----------------------------------------------------------------------------
if __name__ == "__main__":
    B, N, M = 2, 128, 32                      # batch, query tokens, context tokens
    query_dim, key_dim, value_dim = 128, 96, 96
    heads, dim_head = 4, 32                   # inner_dim = 128 (lane-dense)
    HC = heads * dim_head

    key0 = jax.random.PRNGKey(0)
    kx, kk, kv, kwq, kwk, kwv, kwo, kbo = jax.random.split(key0, 8)
    x = jax.random.normal(kx, (B, N, query_dim), dtype=jnp.float32)
    key_t = jax.random.normal(kk, (B, M, key_dim), dtype=jnp.float32)
    value_t = jax.random.normal(kv, (B, M, value_dim), dtype=jnp.float32)

    s = 0.05
    wq = (s * jax.random.normal(kwq, (query_dim, HC))).astype(jnp.float32)
    wk = (s * jax.random.normal(kwk, (key_dim, HC))).astype(jnp.float32)
    wv = (s * jax.random.normal(kwv, (value_dim, HC))).astype(jnp.float32)
    wo = (s * jax.random.normal(kwo, (HC, query_dim))).astype(jnp.float32)
    bo = (s * jax.random.normal(kbo, (1, query_dim))).astype(jnp.float32)

    out = cross_attention(x, key_t, value_t, wq, wk, wv, wo, bo,
                          heads, dim_head, q_block=64)
    out = jax.block_until_ready(out)

    ref = _reference(x, key_t, value_t, wq, wk, wv, wo, bo, heads, dim_head)
    assert out.shape == (B, N, query_dim)
    # bf16 MXU feed + approx reciprocal => compare against the f32 reference
    # with a correspondingly looser tolerance.
    assert jnp.allclose(out, ref, atol=2e-2, rtol=2e-2), "mismatch vs JAX reference"

    print("KERNEL_OK")
</pallas_src>

<mosaic_0001>
module attributes {stable_mosaic.version = 11 : i64} {
  func.func @_cross_attention_kernel(%arg0: i32, %arg1: i32, %arg2: memref<1x64x128xf32, #tpu.memory_space<vmem>>, %arg3: memref<1x32x96xf32, #tpu.memory_space<vmem>>, %arg4: memref<1x32x96xf32, #tpu.memory_space<vmem>>, %arg5: memref<128x128xf32, #tpu.memory_space<vmem>>, %arg6: memref<96x128xf32, #tpu.memory_space<vmem>>, %arg7: memref<96x128xf32, #tpu.memory_space<vmem>>, %arg8: memref<128x128xf32, #tpu.memory_space<vmem>>, %arg9: memref<1x128xf32, #tpu.memory_space<vmem>>, %arg10: memref<1x64x128xf32, #tpu.memory_space<vmem>>) attributes {dimension_semantics = [#tpu.dimension_semantics<parallel>, #tpu.dimension_semantics<parallel>], iteration_bounds = array<i64: 2, 2>, scalar_prefetch = 0 : i64, scratch_operands = 0 : i64, tpu.core_type = #tpu.core_type<tc>, window_params = [{transform_indices = @transform_0, window_bounds = array<i64: 1, 64, 128>}, {transform_indices = @transform_1, window_bounds = array<i64: 1, 32, 96>}, {transform_indices = @transform_2, window_bounds = array<i64: 1, 32, 96>}, {pipeline_mode = #tpu.pipeline_mode<synchronous>, transform_indices = @transform_3, window_bounds = array<i64: 128, 128>}, {pipeline_mode = #tpu.pipeline_mode<synchronous>, transform_indices = @transform_4, window_bounds = array<i64: 96, 128>}, {pipeline_mode = #tpu.pipeline_mode<synchronous>, transform_indices = @transform_5, window_bounds = array<i64: 96, 128>}, {pipeline_mode = #tpu.pipeline_mode<synchronous>, transform_indices = @transform_6, window_bounds = array<i64: 128, 128>}, {pipeline_mode = #tpu.pipeline_mode<synchronous>, transform_indices = @transform_7, window_bounds = array<i64: 1, 128>}, {transform_indices = @transform_8, window_bounds = array<i64: 1, 64, 128>}]} {
    %c0 = arith.constant 0 : index
    %c0_0 = arith.constant 0 : index
    %c0_1 = arith.constant 0 : index
    %0 = vector.load %arg2[%c0, %c0_0, %c0_1] : memref<1x64x128xf32, #tpu.memory_space<vmem>>, vector<1x64x128xf32>
    %1 = vector.shape_cast %0 : vector<1x64x128xf32> to vector<64x128xf32>
    %2 = arith.truncf %1 : vector<64x128xf32> to vector<64x128xbf16>
    %c0_2 = arith.constant 0 : index
    %c0_3 = arith.constant 0 : index
    %c0_4 = arith.constant 0 : index
    %3 = vector.load %arg3[%c0_2, %c0_3, %c0_4] : memref<1x32x96xf32, #tpu.memory_space<vmem>>, vector<1x32x96xf32>
    %4 = vector.shape_cast %3 : vector<1x32x96xf32> to vector<32x96xf32>
    %5 = arith.truncf %4 : vector<32x96xf32> to vector<32x96xbf16>
    %c0_5 = arith.constant 0 : index
    %c0_6 = arith.constant 0 : index
    %c0_7 = arith.constant 0 : index
    %6 = vector.load %arg4[%c0_5, %c0_6, %c0_7] : memref<1x32x96xf32, #tpu.memory_space<vmem>>, vector<1x32x96xf32>
    %7 = vector.shape_cast %6 : vector<1x32x96xf32> to vector<32x96xf32>
    %8 = arith.truncf %7 : vector<32x96xf32> to vector<32x96xbf16>
    %c0_8 = arith.constant 0 : index
    %c0_9 = arith.constant 0 : index
    %9 = vector.load %arg5[%c0_8, %c0_9] : memref<128x128xf32, #tpu.memory_space<vmem>>, vector<128x128xf32>
    %10 = arith.truncf %9 : vector<128x128xf32> to vector<128x128xbf16>
    %cst = arith.constant dense<0.000000e+00> : vector<64x128xf32>
    %11 = tpu.matmul %2, %10, %cst {dimension_numbers = #tpu.dot_dimension_numbers<[1], [0], [0], [1], [0, 0, 1, 1], [], []>} : vector<64x128xbf16>, vector<128x128xbf16>, vector<64x128xf32> -> vector<64x128xf32>
    %cst_10 = arith.constant 0.176776692 : f32
    %12 = vector.broadcast %cst_10 : f32 to vector<64x128xf32>
    %13 = arith.mulf %11, %12 : vector<64x128xf32>
    %c0_11 = arith.constant 0 : index
    %c0_12 = arith.constant 0 : index
    %14 = vector.load %arg6[%c0_11, %c0_12] : memref<96x128xf32, #tpu.memory_space<vmem>>, vector<96x128xf32>
    %15 = arith.truncf %14 : vector<96x128xf32> to vector<96x128xbf16>
    %cst_13 = arith.constant dense<0.000000e+00> : vector<32x128xf32>
    %16 = tpu.matmul %5, %15, %cst_13 {dimension_numbers = #tpu.dot_dimension_numbers<[1], [0], [0], [1], [0, 0, 1, 1], [], []>} : vector<32x96xbf16>, vector<96x128xbf16>, vector<32x128xf32> -> vector<32x128xf32>
    %c0_14 = arith.constant 0 : index
    %c0_15 = arith.constant 0 : index
    %17 = vector.load %arg7[%c0_14, %c0_15] : memref<96x128xf32, #tpu.memory_space<vmem>>, vector<96x128xf32>
    %18 = arith.truncf %17 : vector<96x128xf32> to vector<96x128xbf16>
    %cst_16 = arith.constant dense<0.000000e+00> : vector<32x128xf32>
    %19 = tpu.matmul %8, %18, %cst_16 {dimension_numbers = #tpu.dot_dimension_numbers<[1], [0], [0], [1], [0, 0, 1, 1], [], []>} : vector<32x96xbf16>, vector<96x128xbf16>, vector<32x128xf32> -> vector<32x128xf32>
    %20 = arith.truncf %13 : vector<64x128xf32> to vector<64x128xbf16>
    %21 = vector.extract_strided_slice %20 {offsets = [0, 0], sizes = [64, 32], strides = [1, 1]} : vector<64x128xbf16> to vector<64x32xbf16>
    %22 = vector.extract_strided_slice %20 {offsets = [0, 32], sizes = [64, 32], strides = [1, 1]} : vector<64x128xbf16> to vector<64x32xbf16>
    %23 = vector.extract_strided_slice %20 {offsets = [0, 64], sizes = [64, 32], strides = [1, 1]} : vector<64x128xbf16> to vector<64x32xbf16>
    %24 = vector.extract_strided_slice %20 {offsets = [0, 96], sizes = [64, 32], strides = [1, 1]} : vector<64x128xbf16> to vector<64x32xbf16>
    %25 = vector.shape_cast %21 : vector<64x32xbf16> to vector<1x64x32xbf16>
    %26 = vector.shape_cast %22 : vector<64x32xbf16> to vector<1x64x32xbf16>
    %27 = vector.shape_cast %23 : vector<64x32xbf16> to vector<1x64x32xbf16>
    %28 = vector.shape_cast %24 : vector<64x32xbf16> to vector<1x64x32xbf16>
    %29 = tpu.concatenate %25, %26, %27, %28 in 0 : vector<1x64x32xbf16>, vector<1x64x32xbf16>, vector<1x64x32xbf16>, vector<1x64x32xbf16> -> vector<4x64x32xbf16>
    %30 = arith.truncf %16 : vector<32x128xf32> to vector<32x128xbf16>
    %31 = vector.extract_strided_slice %30 {offsets = [0, 0], sizes = [32, 32], strides = [1, 1]} : vector<32x128xbf16> to vector<32x32xbf16>
    %32 = vector.extract_strided_slice %30 {offsets = [0, 32], sizes = [32, 32], strides = [1, 1]} : vector<32x128xbf16> to vector<32x32xbf16>
    %33 = vector.extract_strided_slice %30 {offsets = [0, 64], sizes = [32, 32], strides = [1, 1]} : vector<32x128xbf16> to vector<32x32xbf16>
    %34 = vector.extract_strided_slice %30 {offsets = [0, 96], sizes = [32, 32], strides = [1, 1]} : vector<32x128xbf16> to vector<32x32xbf16>
    %35 = vector.shape_cast %31 : vector<32x32xbf16> to vector<1x32x32xbf16>
    %36 = vector.shape_cast %32 : vector<32x32xbf16> to vector<1x32x32xbf16>
    %37 = vector.shape_cast %33 : vector<32x32xbf16> to vector<1x32x32xbf16>
    %38 = vector.shape_cast %34 : vector<32x32xbf16> to vector<1x32x32xbf16>
    %39 = tpu.concatenate %35, %36, %37, %38 in 0 : vector<1x32x32xbf16>, vector<1x32x32xbf16>, vector<1x32x32xbf16>, vector<1x32x32xbf16> -> vector<4x32x32xbf16>
    %40 = arith.truncf %19 : vector<32x128xf32> to vector<32x128xbf16>
    %41 = vector.extract_strided_slice %40 {offsets = [0, 0], sizes = [32, 32], strides = [1, 1]} : vector<32x128xbf16> to vector<32x32xbf16>
    %42 = vector.extract_strided_slice %40 {offsets = [0, 32], sizes = [32, 32], strides = [1, 1]} : vector<32x128xbf16> to vector<32x32xbf16>
    %43 = vector.extract_strided_slice %40 {offsets = [0, 64], sizes = [32, 32], strides = [1, 1]} : vector<32x128xbf16> to vector<32x32xbf16>
    %44 = vector.extract_strided_slice %40 {offsets = [0, 96], sizes = [32, 32], strides = [1, 1]} : vector<32x128xbf16> to vector<32x32xbf16>
    %45 = vector.shape_cast %41 : vector<32x32xbf16> to vector<1x32x32xbf16>
    %46 = vector.shape_cast %42 : vector<32x32xbf16> to vector<1x32x32xbf16>
    %47 = vector.shape_cast %43 : vector<32x32xbf16> to vector<1x32x32xbf16>
    %48 = vector.shape_cast %44 : vector<32x32xbf16> to vector<1x32x32xbf16>
    %49 = tpu.concatenate %45, %46, %47, %48 in 0 : vector<1x32x32xbf16>, vector<1x32x32xbf16>, vector<1x32x32xbf16>, vector<1x32x32xbf16> -> vector<4x32x32xbf16>
    "tpu.trace_start"() <{level = 10 : i32, message = "hqc,hkc->hqk"}> : () -> ()
    %cst_17 = arith.constant dense<0.000000e+00> : vector<4x64x32xf32>
    %50 = tpu.matmul %29, %39, %cst_17 {dimension_numbers = #tpu.dot_dimension_numbers<[2], [2], [1], [1], [0, 0, 0, 1, 1, 1], [0], [0]>} : vector<4x64x32xbf16>, vector<4x32x32xbf16>, vector<4x64x32xf32> -> vector<4x64x32xf32>
    "tpu.trace_stop"() : () -> ()
    %cst_18 = arith.constant dense<0xFF800000> : vector<4x64xf32>
    %51 = vector.multi_reduction <maximumf>, %50, %cst_18 [2] : vector<4x64x32xf32> to vector<4x64xf32>
    %52 = vector.shape_cast %51 : vector<4x64xf32> to vector<4x64x1xf32>
    %53 = vector.broadcast %52 : vector<4x64x1xf32> to vector<4x64x32xf32>
    %54 = arith.subf %50, %53 : vector<4x64x32xf32>
    %55 = math.exp %54 : vector<4x64x32xf32>
    %cst_19 = arith.constant dense<0.000000e+00> : vector<4x64xf32>
    %56 = vector.multi_reduction <add>, %55, %cst_19 [2] : vector<4x64x32xf32> to vector<4x64xf32>
    %57 = vector.shape_cast %56 : vector<4x64xf32> to vector<4x64x1xf32>
    %58 = tpu.reciprocal %57 {approx = true} : vector<4x64x1xf32> -> vector<4x64x1xf32>
    %59 = vector.broadcast %58 : vector<4x64x1xf32> to vector<4x64x32xf32>
    %60 = arith.mulf %55, %59 : vector<4x64x32xf32>
    %61 = arith.truncf %60 : vector<4x64x32xf32> to vector<4x64x32xbf16>
    "tpu.trace_start"() <{level = 10 : i32, message = "hqk,hkc->hqc"}> : () -> ()
    %cst_20 = arith.constant dense<0.000000e+00> : vector<4x64x32xf32>
    %62 = tpu.matmul %61, %49, %cst_20 {dimension_numbers = #tpu.dot_dimension_numbers<[2], [1], [1], [2], [0, 0, 0, 1, 1, 2], [0], [0]>} : vector<4x64x32xbf16>, vector<4x32x32xbf16>, vector<4x64x32xf32> -> vector<4x64x32xf32>
    %cst_21 = arith.constant 0.000000e+00 : f32
    "tpu.trace_stop"() : () -> ()
    %63 = vector.broadcast %cst_21 : f32 to vector<64x128xf32>
    %64 = vector.extract_strided_slice %62 {offsets = [0, 0, 0], sizes = [1, 64, 32], strides = [1, 1, 1]} : vector<4x64x32xf32> to vector<1x64x32xf32>
    %65 = vector.shape_cast %64 : vector<1x64x32xf32> to vector<64x32xf32>
    %66 = arith.truncf %65 : vector<64x32xf32> to vector<64x32xbf16>
    %c0_22 = arith.constant 0 : index
    %c0_23 = arith.constant 0 : index
    %67 = vector.load %arg8[%c0_22, %c0_23] : memref<128x128xf32, #tpu.memory_space<vmem>>, vector<32x128xf32>
    %68 = arith.truncf %67 : vector<32x128xf32> to vector<32x128xbf16>
    %cst_24 = arith.constant dense<0.000000e+00> : vector<64x128xf32>
    %69 = tpu.matmul %66, %68, %cst_24 {dimension_numbers = #tpu.dot_dimension_numbers<[1], [0], [0], [1], [0, 0, 1, 1], [], []>} : vector<64x32xbf16>, vector<32x128xbf16>, vector<64x128xf32> -> vector<64x128xf32>
    %70 = arith.addf %63, %69 : vector<64x128xf32>
    %71 = vector.extract_strided_slice %62 {offsets = [1, 0, 0], sizes = [1, 64, 32], strides = [1, 1, 1]} : vector<4x64x32xf32> to vector<1x64x32xf32>
    %72 = vector.shape_cast %71 : vector<1x64x32xf32> to vector<64x32xf32>
    %73 = arith.truncf %72 : vector<64x32xf32> to vector<64x32xbf16>
    %c32 = arith.constant 32 : index
    %c0_25 = arith.constant 0 : index
    %74 = vector.load %arg8[%c32, %c0_25] : memref<128x128xf32, #tpu.memory_space<vmem>>, vector<32x128xf32>
    %75 = arith.truncf %74 : vector<32x128xf32> to vector<32x128xbf16>
    %cst_26 = arith.constant dense<0.000000e+00> : vector<64x128xf32>
    %76 = tpu.matmul %73, %75, %cst_26 {dimension_numbers = #tpu.dot_dimension_numbers<[1], [0], [0], [1], [0, 0, 1, 1], [], []>} : vector<64x32xbf16>, vector<32x128xbf16>, vector<64x128xf32> -> vector<64x128xf32>
    %77 = arith.addf %70, %76 : vector<64x128xf32>
    %78 = vector.extract_strided_slice %62 {offsets = [2, 0, 0], sizes = [1, 64, 32], strides = [1, 1, 1]} : vector<4x64x32xf32> to vector<1x64x32xf32>
    %79 = vector.shape_cast %78 : vector<1x64x32xf32> to vector<64x32xf32>
    %80 = arith.truncf %79 : vector<64x32xf32> to vector<64x32xbf16>
    %c64 = arith.constant 64 : index
    %c0_27 = arith.constant 0 : index
    %81 = vector.load %arg8[%c64, %c0_27] : memref<128x128xf32, #tpu.memory_space<vmem>>, vector<32x128xf32>
    %82 = arith.truncf %81 : vector<32x128xf32> to vector<32x128xbf16>
    %cst_28 = arith.constant dense<0.000000e+00> : vector<64x128xf32>
    %83 = tpu.matmul %80, %82, %cst_28 {dimension_numbers = #tpu.dot_dimension_numbers<[1], [0], [0], [1], [0, 0, 1, 1], [], []>} : vector<64x32xbf16>, vector<32x128xbf16>, vector<64x128xf32> -> vector<64x128xf32>
    %84 = arith.addf %77, %83 : vector<64x128xf32>
    %85 = vector.extract_strided_slice %62 {offsets = [3, 0, 0], sizes = [1, 64, 32], strides = [1, 1, 1]} : vector<4x64x32xf32> to vector<1x64x32xf32>
    %86 = vector.shape_cast %85 : vector<1x64x32xf32> to vector<64x32xf32>
    %87 = arith.truncf %86 : vector<64x32xf32> to vector<64x32xbf16>
    %c96 = arith.constant 96 : index
    %c0_29 = arith.constant 0 : index
    %88 = vector.load %arg8[%c96, %c0_29] : memref<128x128xf32, #tpu.memory_space<vmem>>, vector<32x128xf32>
    %89 = arith.truncf %88 : vector<32x128xf32> to vector<32x128xbf16>
    %cst_30 = arith.constant dense<0.000000e+00> : vector<64x128xf32>
    %90 = tpu.matmul %87, %89, %cst_30 {dimension_numbers = #tpu.dot_dimension_numbers<[1], [0], [0], [1], [0, 0, 1, 1], [], []>} : vector<64x32xbf16>, vector<32x128xbf16>, vector<64x128xf32> -> vector<64x128xf32>
    %91 = arith.addf %84, %90 : vector<64x128xf32>
    %c0_31 = arith.constant 0 : index
    %c0_32 = arith.constant 0 : index
    %92 = vector.load %arg9[%c0_31, %c0_32] : memref<1x128xf32, #tpu.memory_space<vmem>>, vector<1x128xf32>
    %93 = vector.broadcast %92 : vector<1x128xf32> to vector<64x128xf32>
    %94 = arith.addf %91, %93 : vector<64x128xf32>
    %c0_33 = arith.constant 0 : index
    %c0_34 = arith.constant 0 : index
    %c0_35 = arith.constant 0 : index
    %95 = vector.load %arg10[%c0_33, %c0_34, %c0_35] : memref<1x64x128xf32, #tpu.memory_space<vmem>>, vector<1x64x128xf32>
    %96 = vector.shape_cast %95 : vector<1x64x128xf32> to vector<64x128xf32>
    %97 = vector.shape_cast %94 : vector<64x128xf32> to vector<1x64x128xf32>
    tpu.vector_store %arg10[%c0_33, %c0_34, %c0_35], %97 {strides = array<i32>} : memref<1x64x128xf32, #tpu.memory_space<vmem>>, vector<1x64x128xf32>,
    return
  }
  func.func @transform_0(%arg0: i32, %arg1: i32) -> (i32, i32, i32) {
    %c0_i32 = arith.constant 0 : i32
    %c0_i32_0 = arith.constant 0 : i32
    return %arg0, %arg1, %c0_i32 : i32, i32, i32
  }
  func.func @transform_1(%arg0: i32, %arg1: i32) -> (i32, i32, i32) {
    %c0_i32 = arith.constant 0 : i32
    %c0_i32_0 = arith.constant 0 : i32
    %c0_i32_1 = arith.constant 0 : i32
    return %arg0, %c0_i32, %c0_i32_0 : i32, i32, i32
  }
  func.func @transform_2(%arg0: i32, %arg1: i32) -> (i32, i32, i32) {
    %c0_i32 = arith.constant 0 : i32
    %c0_i32_0 = arith.constant 0 : i32
    %c0_i32_1 = arith.constant 0 : i32
    return %arg0, %c0_i32, %c0_i32_0 : i32, i32, i32
  }
  func.func @transform_3(%arg0: i32, %arg1: i32) -> (i32, i32) {
    %c0_i32 = arith.constant 0 : i32
    %c0_i32_0 = arith.constant 0 : i32
    %c0_i32_1 = arith.constant 0 : i32
    return %c0_i32, %c0_i32_0 : i32, i32
  }
  func.func @transform_4(%arg0: i32, %arg1: i32) -> (i32, i32) {
    %c0_i32 = arith.constant 0 : i32
    %c0_i32_0 = arith.constant 0 : i32
    %c0_i32_1 = arith.constant 0 : i32
    return %c0_i32, %c0_i32_0 : i32, i32
  }
  func.func @transform_5(%arg0: i32, %arg1: i32) -> (i32, i32) {
    %c0_i32 = arith.constant 0 : i32
    %c0_i32_0 = arith.constant 0 : i32
    %c0_i32_1 = arith.constant 0 : i32
    return %c0_i32, %c0_i32_0 : i32, i32
  }
  func.func @transform_6(%arg0: i32, %arg1: i32) -> (i32, i32) {
    %c0_i32 = arith.constant 0 : i32
    %c0_i32_0 = arith.constant 0 : i32
    %c0_i32_1 = arith.constant 0 : i32
    return %c0_i32, %c0_i32_0 : i32, i32
  }
  func.func @transform_7(%arg0: i32, %arg1: i32) -> (i32, i32) {
    %c0_i32 = arith.constant 0 : i32
    %c0_i32_0 = arith.constant 0 : i32
    %c0_i32_1 = arith.constant 0 : i32
    return %c0_i32, %c0_i32_0 : i32, i32
  }
  func.func @transform_8(%arg0: i32, %arg1: i32) -> (i32, i32, i32) {
    %c0_i32 = arith.constant 0 : i32
    %c0_i32_0 = arith.constant 0 : i32
    return %arg0, %arg1, %c0_i32 : i32, i32, i32
  }
}

</mosaic_0001>

<llo_original>
// kernel: tpu_custom_call.1
$region0: #{tpu_custom_call.1}
  #allocation0 [shape = 'u32[]', space=smem, size = 0x4, offset = 0x4, fixed_abs, tag = 'smem constant byte address 0x4 - core index']
  #allocation1 [shape = 'u32[72,128]{1,0:T(1,128)}', space=vmem, size = 0x9000, scoped, tag = 'internal scratch']
  %s0 = inlined_call_operand.hbm [shape: f32[2,128,128], index: 0, kind: input, shape index: {}]
  %s1 = inlined_call_operand.hbm [shape: f32[2,32,96], index: 1, kind: input, shape index: {}]
  %s2 = inlined_call_operand.hbm [shape: f32[2,32,96], index: 2, kind: input, shape index: {}]
  %s3 = inlined_call_operand.hbm [shape: f32[128,128], index: 3, kind: input, shape index: {}]
  %s4 = inlined_call_operand.hbm [shape: f32[96,128], index: 4, kind: input, shape index: {}]
  %s5 = inlined_call_operand.hbm [shape: f32[96,128], index: 5, kind: input, shape index: {}]
  %s6 = inlined_call_operand.hbm [shape: f32[128,128], index: 6, kind: input, shape index: {}]
  %s7 = inlined_call_operand.vmem [shape: f32[1,128], index: 7, kind: input, shape index: {}]
  %s8 = inlined_call_operand.hbm [shape: f32[2,128,128], index: 8, kind: output, shape index: {}]
  %s9 = sld [smem:[#allocation0]]
  $region93: #{tpu_custom_call.1} parent=0
    _
  %s11 = ssub.s32 1, %s9
  %s12 = scalar_select 0, %s11, %s9
  $region1: #{tpu_custom_call.1} parent=0
    #allocation2 [shape = 'u8[65536]{0}', space=vmem, size = 0x10000, scoped, tag = 'input window, operand 0']
    #allocation3 [shape = 's32[2]{0}', space=sflag, size = 0x8, scoped, tag = 'scoped memory for tpu_custom_call.1']
    #allocation4 [shape = 's32[2]{0}', space=sflag, size = 0x8, scoped, tag = 'scoped memory for tpu_custom_call.1']
    #allocation5 [shape = 'u8[32768]{0}', space=vmem, size = 0x8000, scoped, tag = 'input window, operand 1']
    #allocation6 [shape = 's32[2]{0}', space=sflag, size = 0x8, scoped, tag = 'scoped memory for tpu_custom_call.1']
    #allocation7 [shape = 'u8[32768]{0}', space=vmem, size = 0x8000, scoped, tag = 'input window, operand 2']
    #allocation8 [shape = 'u8[65536]{0}', space=vmem, size = 0x10000, scoped, tag = 'input window, operand 3, single buffered']
    #allocation9 [shape = 's32[1]{0}', space=sflag, size = 0x4, scoped, tag = 'scoped memory for tpu_custom_call.1']
    #allocation10 [shape = 'u8[49152]{0}', space=vmem, size = 0xc000, scoped, tag = 'input window, operand 4, single buffered']
    #allocation11 [shape = 'u8[49152]{0}', space=vmem, size = 0xc000, scoped, tag = 'input window, operand 5, single buffered']
    #allocation12 [shape = 's32[1]{0}', space=sflag, size = 0x4, scoped, tag = 'scoped memory for tpu_custom_call.1']
    #allocation13 [shape = 'u8[65536]{0}', space=vmem, size = 0x10000, scoped, tag = 'input window, operand 6, single buffered']
    #allocation14 [shape = 'u8[65536]{0}', space=vmem, size = 0x10000, scoped, tag = 'output window, operand 0']
    %13 = vsyncpa [#allocation3], 0
    %s14 = scalar_lea.sflag [#allocation3], 1
    %15 = vsyncpa %s14, 0
    %16 = vsyncpa [#allocation6], 0
    %s17 = scalar_lea.sflag [#allocation6], 1
    %18 = vsyncpa %s17, 0
    %19 = vsyncpa [#allocation9], 0
    %20 = vsyncpa [#allocation12], 0
    %21 = vsyncpa [#allocation4], 0
    %s22 = scalar_lea.sflag [#allocation4], 1
    %23 = vsyncpa %s22, 0
    loop: start=0, step=1, limit=6
    $region2: #{tpu_custom_call.1} parent=1 // loop_pre_header
      _
    $region3: #{tpu_custom_call.1} parent=1 // loop_header
      %s25 = sphi 0, %s29
      %p26 = scmp.ge.s32.totalorder %s25, 6
      %s32 = sphi 0, %s44
      %s33 = sphi 0, %s40
      %s34 = sphi 0, %s32
      %s35 = sphi 0, %s33
      %s36 = sphi 0, %s34
      %s37 = sphi 0, %s35
      %s49 = sphi 0, %s51
      %s52 = sphi 0, %s49
      %s53 = sphi 0, %s52
      %s69 = sphi 0, %s53
      %s75 = sphi 0, %s77
      %s78 = sphi 0, %s75
      %s79 = sphi 0, %s78
      %s95 = sphi 0, %s79
      %s101 = sphi 0, %s103
      %s104 = sphi 0, %s101
      %s105 = sphi 0, %s104
      %s121 = sphi 0, %s105
      %s125 = sphi 0, %s125
      %s127 = sphi 0, %s125
      %s128 = sphi 0, %s127
      %s142 = sphi 0, %s128
      %s146 = sphi 0, %s146
      %s148 = sphi 0, %s146
      %s149 = sphi 0, %s148
      %s163 = sphi 0, %s149
      %s167 = sphi 0, %s167
      %s169 = sphi 0, %s167
      %s170 = sphi 0, %s169
      %s184 = sphi 0, %s170
      %s188 = sphi 0, %s188
      %s190 = sphi 0, %s188
      %s191 = sphi 0, %s190
      %s205 = sphi 0, %s191
      %s209 = sphi 0, %s209
      %s211 = sphi 0, %s209
      %s212 = sphi 0, %s211
      %s226 = sphi 0, %s212
      %s234 = sphi 0, %s236
      %s237 = sphi 0, %s234
      %s238 = sphi 0, %s237
      %s254 = sphi 0, %s238
    $region4: #{tpu_custom_call.1} parent=1 // loop_header_branch
      %28 = sbr.rel (%p26) target = $region8
    $region5: #{tpu_custom_call.1} parent=1 // loop_body
      %s30 = ssub.s32 %s25, 1
      %s31 = ssub.s32 %s25, 2
      %s38 = sadd.s32 1, %s33
      %p39 = scmp.ge.s32.totalorder %s38, 2
      %s40 = scalar_select %p39, 0, %s38
      %s41 = sadd.s32 1, %s32
      %s42 = scalar_select %p39, %s41, %s32
      %p43 = scmp.ge.s32.totalorder %s42, 2
      %s44 = scalar_select %p43, 0, %s42
      %s45 = ssub.s32 %s32, %s44
      %s46 = ssub.s32 %s33, %s40
      %s47 = sor.u32 %s45, %s46
      %p48 = scmp.eq.s32.totalorder %s47, 0
      %s50 = sadd.s32 %s49, 1
      %s51 = scalar_select %p48, %s49, %s50
      %p54 = pneg %p48
      %p55 = scmp.eq.s32.totalorder %s25, 3
      %p56 = por %p54, %p55
      %p57 = scmp.ne.s32.totalorder %s49, %s52
      %p58 = scmp.eq.s32.totalorder %s25, 0
      %p59 = por %p57, %p58
      %p60 = scmp.ne.s32.totalorder %s49, %s52
      %p61 = scmp.eq.s32.totalorder %s30, 3
      %p62 = por %p60, %p61
      %p63 = scmp.ne.s32.totalorder %s52, %s53
      %p64 = scmp.eq.s32.totalorder %s30, 0
      %p65 = por %p63, %p64
      %p66 = scmp.ne.s32.totalorder %s52, %s53
      %p67 = scmp.eq.s32.totalorder %s31, 3
      %p68 = por %p66, %p67
      %p70 = scmp.ne.s32.totalorder %s53, %s69
      %p71 = scmp.eq.s32.totalorder %s31, 0
      %p72 = por %p70, %p71
      %s73 = ssub.s32 %s32, %s44
      %p74 = scmp.eq.s32.totalorder %s73, 0
      %s76 = sadd.s32 %s75, 1
      %s77 = scalar_select %p74, %s75, %s76
      %p80 = pneg %p74
      %p81 = scmp.eq.s32.totalorder %s25, 3
      %p82 = por %p80, %p81
      %p83 = scmp.ne.s32.totalorder %s75, %s78
      %p84 = scmp.eq.s32.totalorder %s25, 0
      %p85 = por %p83, %p84
      %p86 = scmp.ne.s32.totalorder %s75, %s78
      %p87 = scmp.eq.s32.totalorder %s30, 3
      %p88 = por %p86, %p87
      %p89 = scmp.ne.s32.totalorder %s78, %s79
      %p90 = scmp.eq.s32.totalorder %s30, 0
      %p91 = por %p89, %p90
      %p92 = scmp.ne.s32.totalorder %s78, %s79
      %p93 = scmp.eq.s32.totalorder %s31, 3
      %p94 = por %p92, %p93
      %p96 = scmp.ne.s32.totalorder %s79, %s95
      %p97 = scmp.eq.s32.totalorder %s31, 0
      %p98 = por %p96, %p97
      %s99 = ssub.s32 %s32, %s44
      %p100 = scmp.eq.s32.totalorder %s99, 0
      %s102 = sadd.s32 %s101, 1
      %s103 = scalar_select %p100, %s101, %s102
      %p106 = pneg %p100
      %p107 = scmp.eq.s32.totalorder %s25, 3
      %p108 = por %p106, %p107
      %p109 = scmp.ne.s32.totalorder %s101, %s104
      %p110 = scmp.eq.s32.totalorder %s25, 0
      %p111 = por %p109, %p110
      %p112 = scmp.ne.s32.totalorder %s101, %s104
      %p113 = scmp.eq.s32.totalorder %s30, 3
      %p114 = por %p112, %p113
      %p115 = scmp.ne.s32.totalorder %s104, %s105
      %p116 = scmp.eq.s32.totalorder %s30, 0
      %p117 = por %p115, %p116
      %p118 = scmp.ne.s32.totalorder %s104, %s105
      %p119 = scmp.eq.s32.totalorder %s31, 3
      %p120 = por %p118, %p119
      %p122 = scmp.ne.s32.totalorder %s105, %s121
      %p123 = scmp.eq.s32.totalorder %s31, 0
      %p124 = por %p122, %p123
      %s126 = sadd.s32 %s125, 1
      %p129 = scmp.eq.s32.totalorder %s25, 3
      %p130 = scmp.ne.s32.totalorder %s125, %s127
      %p131 = scmp.eq.s32.totalorder %s25, 0
      %p132 = por %p130, %p131
      %p133 = scmp.ne.s32.totalorder %s125, %s127
      %p134 = scmp.eq.s32.totalorder %s30, 3
      %p135 = por %p133, %p134
      %p136 = scmp.ne.s32.totalorder %s127, %s128
      %p137 = scmp.eq.s32.totalorder %s30, 0
      %p138 = por %p136, %p137
      %p139 = scmp.ne.s32.totalorder %s127, %s128
      %p140 = scmp.eq.s32.totalorder %s31, 3
      %p141 = por %p139, %p140
      %p143 = scmp.ne.s32.totalorder %s128, %s142
      %p144 = scmp.eq.s32.totalorder %s31, 0
      %p145 = por %p143, %p144
      %s147 = sadd.s32 %s146, 1
      %p150 = scmp.eq.s32.totalorder %s25, 3
      %p151 = scmp.ne.s32.totalorder %s146, %s148
      %p152 = scmp.eq.s32.totalorder %s25, 0
      %p153 = por %p151, %p152
      %p154 = scmp.ne.s32.totalorder %s146, %s148
      %p155 = scmp.eq.s32.totalorder %s30, 3
      %p156 = por %p154, %p155
      %p157 = scmp.ne.s32.totalorder %s148, %s149
      %p158 = scmp.eq.s32.totalorder %s30, 0
      %p159 = por %p157, %p158
      %p160 = scmp.ne.s32.totalorder %s148, %s149
      %p161 = scmp.eq.s32.totalorder %s31, 3
      %p162 = por %p160, %p161
      %p164 = scmp.ne.s32.totalorder %s149, %s163
      %p165 = scmp.eq.s32.totalorder %s31, 0
      %p166 = por %p164, %p165
      %s168 = sadd.s32 %s167, 1
      %p171 = scmp.eq.s32.totalorder %s25, 3
      %p172 = scmp.ne.s32.totalorder %s167, %s169
      %p173 = scmp.eq.s32.totalorder %s25, 0
      %p174 = por %p172, %p173
      %p175 = scmp.ne.s32.totalorder %s167, %s169
      %p176 = scmp.eq.s32.totalorder %s30, 3
      %p177 = por %p175, %p176
      %p178 = scmp.ne.s32.totalorder %s169, %s170
      %p179 = scmp.eq.s32.totalorder %s30, 0
      %p180 = por %p178, %p179
      %p181 = scmp.ne.s32.totalorder %s169, %s170
      %p182 = scmp.eq.s32.totalorder %s31, 3
      %p183 = por %p181, %p182
      %p185 = scmp.ne.s32.totalorder %s170, %s184
      %p186 = scmp.eq.s32.totalorder %s31, 0
      %p187 = por %p185, %p186
      %s189 = sadd.s32 %s188, 1
      %p192 = scmp.eq.s32.totalorder %s25, 3
      %p193 = scmp.ne.s32.totalorder %s188, %s190
      %p194 = scmp.eq.s32.totalorder %s25, 0
      %p195 = por %p193, %p194
      %p196 = scmp.ne.s32.totalorder %s188, %s190
      %p197 = scmp.eq.s32.totalorder %s30, 3
      %p198 = por %p196, %p197
      %p199 = scmp.ne.s32.totalorder %s190, %s191
      %p200 = scmp.eq.s32.totalorder %s30, 0
      %p201 = por %p199, %p200
      %p202 = scmp.ne.s32.totalorder %s190, %s191
      %p203 = scmp.eq.s32.totalorder %s31, 3
      %p204 = por %p202, %p203
      %p206 = scmp.ne.s32.totalorder %s191, %s205
      %p207 = scmp.eq.s32.totalorder %s31, 0
      %p208 = por %p206, %p207
      %s210 = sadd.s32 %s209, 1
      %p213 = scmp.eq.s32.totalorder %s25, 3
      %p214 = scmp.ne.s32.totalorder %s209, %s211
      %p215 = scmp.eq.s32.totalorder %s25, 0
      %p216 = por %p214, %p215
      %p217 = scmp.ne.s32.totalorder %s209, %s211
      %p218 = scmp.eq.s32.totalorder %s30, 3
      %p219 = por %p217, %p218
      %p220 = scmp.ne.s32.totalorder %s211, %s212
      %p221 = scmp.eq.s32.totalorder %s30, 0
      %p222 = por %p220, %p221
      %p223 = scmp.ne.s32.totalorder %s211, %s212
      %p224 = scmp.eq.s32.totalorder %s31, 3
      %p225 = por %p223, %p224
      %p227 = scmp.ne.s32.totalorder %s212, %s226
      %p228 = scmp.eq.s32.totalorder %s31, 0
      %p229 = por %p227, %p228
      %s230 = ssub.s32 %s32, %s44
      %s231 = ssub.s32 %s33, %s40
      %s232 = sor.u32 %s230, %s231
      %p233 = scmp.eq.s32.totalorder %s232, 0
      %s235 = sadd.s32 %s234, 1
      %s236 = scalar_select %p233, %s234, %s235
      %p239 = pneg %p233
      %p240 = scmp.eq.s32.totalorder %s25, 3
      %p241 = por %p239, %p240
      %p242 = scmp.ne.s32.totalorder %s234, %s237
      %p243 = scmp.eq.s32.totalorder %s25, 0
      %p244 = por %p242, %p243
      %p245 = scmp.ne.s32.totalorder %s234, %s237
      %p246 = scmp.eq.s32.totalorder %s30, 3
      %p247 = por %p245, %p246
      %p248 = scmp.ne.s32.totalorder %s237, %s238
      %p249 = scmp.eq.s32.totalorder %s30, 0
      %p250 = por %p248, %p249
      %p251 = scmp.ne.s32.totalorder %s237, %s238
      %p252 = scmp.eq.s32.totalorder %s31, 3
      %p253 = por %p251, %p252
      %p255 = scmp.ne.s32.totalorder %s238, %s254
      %p256 = scmp.eq.s32.totalorder %s31, 0
      %p257 = por %p255, %p256
      %p258 = scmp.le.s32.totalorder 1, %s25
      %p259 = scmp.lt.s32.totalorder %s25, 5
      %p260 = pnand %p258, %p259
      %p261 = pneg %p260
      // Predicated region
      $region9: #{tpu_custom_call.1} parent=5 // pred_check
        _
      $region10: #{tpu_custom_call.1} parent=5 // pred_check_branch
        %263 = sbr.rel (%p260) target = $region12
      $region11: #{tpu_custom_call.1} parent=5 // pred_region
        %s264 = ssub.s32 %s25, 1
        // Predicated region
        $region13: #{tpu_custom_call.1} parent=11 // pred_check
          %p265 = pneg %p138
        $region14: #{tpu_custom_call.1} parent=11 // pred_check_branch
          %267 = sbr.rel (%p265) target = $region16
        $region15: #{tpu_custom_call.1} parent=11 // pred_region
          %269 = vsyncadd [#allocation9], 0
          %s270 = sshll.u32 %s3, 4
          %s271 = int_to_ptr.hbm [resolvable:$true] %s270
          %s272 = sshll.u32 [#allocation8], 4
          %s273 = int_to_ptr.vmem [resolvable:$true] %s272
          %278 = dma.hbm_to_vmem [thread:$0]  %s271, 2048, %s273, [#allocation9], 128, 128, 8
        $region16: #{tpu_custom_call.1} parent=11 // pred_fallthru
          _
        // Predicated region
        $region17: #{tpu_custom_call.1} parent=11 // pred_check
          %p279 = pneg %p159
        $region18: #{tpu_custom_call.1} parent=11 // pred_check_branch
          %281 = sbr.rel (%p279) target = $region20
        $region19: #{tpu_custom_call.1} parent=11 // pred_region
          %283 = vsyncadd [#allocation9], 0
          %s284 = sshll.u32 %s4, 4
          %s285 = int_to_ptr.hbm [resolvable:$true] %s284
          %s286 = sshll.u32 [#allocation10], 4
          %s287 = int_to_ptr.vmem [resolvable:$true] %s286
          %292 = dma.hbm_to_vmem [thread:$0]  %s285, 1536, %s287, [#allocation9], 128, 128, 8
        $region20: #{tpu_custom_call.1} parent=11 // pred_fallthru
          _
        // Predicated region
        $region21: #{tpu_custom_call.1} parent=11 // pred_check
          %p293 = pneg %p180
        $region22: #{tpu_custom_call.1} parent=11 // pred_check_branch
          %295 = sbr.rel (%p293) target = $region24
        $region23: #{tpu_custom_call.1} parent=11 // pred_region
          %297 = vsyncadd [#allocation12], 0
          %s298 = sshll.u32 %s5, 4
          %s299 = int_to_ptr.hbm [resolvable:$true] %s298
          %s300 = sshll.u32 [#allocation11], 4
          %s301 = int_to_ptr.vmem [resolvable:$true] %s300
          %306 = dma.hbm_to_vmem [thread:$0]  %s299, 1536, %s301, [#allocation12], 128, 128, 8
        $region24: #{tpu_custom_call.1} parent=11 // pred_fallthru
          _
        // Predicated region
        $region25: #{tpu_custom_call.1} parent=11 // pred_check
          %p307 = pneg %p201
        $region26: #{tpu_custom_call.1} parent=11 // pred_check_branch
          %309 = sbr.rel (%p307) target = $region28
        $region27: #{tpu_custom_call.1} parent=11 // pred_region
          %311 = vsyncadd [#allocation12], 0
          %s312 = sshll.u32 %s6, 4
          %s313 = int_to_ptr.hbm [resolvable:$true] %s312
          %s314 = sshll.u32 [#allocation13], 4
          %s315 = int_to_ptr.vmem [resolvable:$true] %s314
          %320 = dma.hbm_to_vmem [thread:$0]  %s313, 2048, %s315, [#allocation12], 128, 128, 8
        $region28: #{tpu_custom_call.1} parent=11 // pred_fallthru
          _
        // Predicated region
        $region29: #{tpu_custom_call.1} parent=11 // pred_check
          %p321 = pneg %p222
        $region30: #{tpu_custom_call.1} parent=11 // pred_check_branch
          %323 = sbr.rel (%p321) target = $region32
        $region31: #{tpu_custom_call.1} parent=11 // pred_region
          _
        $region32: #{tpu_custom_call.1} parent=11 // pred_fallthru
          _
      $region12: #{tpu_custom_call.1} parent=5 // pred_fallthru
        _
      %p324 = scmp.lt.s32.totalorder %s25, 4
      // Predicated region
      $region33: #{tpu_custom_call.1} parent=5 // pred_check
        %p325 = pneg %p324
      $region34: #{tpu_custom_call.1} parent=5 // pred_check_branch
        %327 = sbr.rel (%p325) target = $region36
      $region35: #{tpu_custom_call.1} parent=5 // pred_region
        // Predicated region
        $region37: #{tpu_custom_call.1} parent=35 // pred_check
          %p328 = pneg %p59
        $region38: #{tpu_custom_call.1} parent=35 // pred_check_branch
          %330 = sbr.rel (%p328) target = $region40
        $region39: #{tpu_custom_call.1} parent=35 // pred_region
          %s331 = sand.u32 %s49, 1
          %s332 = scalar_lea.sflag [#allocation3], %s331
          %s333 = sand.u32 %s49, 1
          %s334 = smul.addr %s333, 64
          %s335 = scalar_lea.vmem [#allocation2], %s334
          %s336 = smul.u32 8, %s33
          %338 = vsyncadd %s332, 0
          %s339 = smul.addr %s32, 16
          %s340 = sadd.s32 %s336, %s339
          %s341 = smul.addr %s340, 8
          %s342 = scalar_lea.hbm %s0, %s341
          %s343 = sshll.u32 %s342, 4
          %s344 = int_to_ptr.hbm [resolvable:$true] %s343
          %s345 = sshll.u32 %s335, 4
          %s346 = int_to_ptr.vmem [resolvable:$true] %s345
          %351 = dma.hbm_to_vmem [thread:$0]  %s344, 1024, %s346, %s332, 128, 128, 8
        $region40: #{tpu_custom_call.1} parent=35 // pred_fallthru
          _
        // Predicated region
        $region41: #{tpu_custom_call.1} parent=35 // pred_check
          %p352 = pneg %p85
        $region42: #{tpu_custom_call.1} parent=35 // pred_check_branch
          %354 = sbr.rel (%p352) target = $region44
        $region43: #{tpu_custom_call.1} parent=35 // pred_region
          %s355 = sand.u32 %s25, 1
          %s356 = scalar_lea.sflag [#allocation6], %s355
          %s357 = sand.u32 %s75, 1
          %s358 = smul.addr %s357, 32
          %s359 = scalar_lea.vmem [#allocation5], %s358
          %361 = vsyncadd %s356, 0
          %s362 = smul.addr %s32, 4
          %s363 = smul.addr %s362, 8
          %s364 = scalar_lea.hbm %s1, %s363
          %s365 = sshll.u32 %s364, 4
          %s366 = int_to_ptr.hbm [resolvable:$true] %s365
          %s367 = sshll.u32 %s359, 4
          %s368 = int_to_ptr.vmem [resolvable:$true] %s367
          %373 = dma.hbm_to_vmem [thread:$0]  %s366, 512, %s368, %s356, 128, 128, 8
        $region44: #{tpu_custom_call.1} parent=35 // pred_fallthru
          _
        // Predicated region
        $region45: #{tpu_custom_call.1} parent=35 // pred_check
          %p374 = pneg %p111
        $region46: #{tpu_custom_call.1} parent=35 // pred_check_branch
          %376 = sbr.rel (%p374) target = $region48
        $region47: #{tpu_custom_call.1} parent=35 // pred_region
          %s377 = sand.u32 %s25, 1
          %s378 = scalar_lea.sflag [#allocation6], %s377
          %s379 = sand.u32 %s101, 1
          %s380 = smul.addr %s379, 32
          %s381 = scalar_lea.vmem [#allocation7], %s380
          %383 = vsyncadd %s378, 0
          %s384 = smul.addr %s32, 4
          %s385 = smul.addr %s384, 8
          %s386 = scalar_lea.hbm %s2, %s385
          %s387 = sshll.u32 %s386, 4
          %s388 = int_to_ptr.hbm [resolvable:$true] %s387
          %s389 = sshll.u32 %s381, 4
          %s390 = int_to_ptr.vmem [resolvable:$true] %s389
          %395 = dma.hbm_to_vmem [thread:$0]  %s388, 512, %s390, %s378, 128, 128, 8
        $region48: #{tpu_custom_call.1} parent=35 // pred_fallthru
          _
      $region36: #{tpu_custom_call.1} parent=5 // pred_fallthru
        _
      %p396 = scmp.le.s32.totalorder 1, %s25
      %p397 = scmp.lt.s32.totalorder %s25, 5
      %p398 = pnand %p396, %p397
      %p399 = pneg %p398
      // Predicated region
      $region49: #{tpu_custom_call.1} parent=5 // pred_check
        _
      $region50: #{tpu_custom_call.1} parent=5 // pred_check_branch
        %401 = sbr.rel (%p398) target = $region52
      $region51: #{tpu_custom_call.1} parent=5 // pred_region
        %s402 = ssub.s32 %s25, 1
        %s403 = sand.u32 %s52, 1
        %s404 = scalar_lea.sflag [#allocation3], %s403
        %s405 = sand.u32 %s52, 1
        %s406 = smul.addr %s405, 64
        %s407 = scalar_lea.vmem [#allocation2], %s406
        // Predicated region
        $region53: #{tpu_custom_call.1} parent=51 // pred_check
          %p408 = pneg %p65
        $region54: #{tpu_custom_call.1} parent=51 // pred_check_branch
          %410 = sbr.rel (%p408) target = $region56
        $region55: #{tpu_custom_call.1} parent=51 // pred_region
          %412 = dma.done %s404, 1024
        $region56: #{tpu_custom_call.1} parent=51 // pred_fallthru
          _
        %s413 = sand.u32 %s30, 1
        %s414 = scalar_lea.sflag [#allocation6], %s413
        %s415 = sand.u32 %s78, 1
        %s416 = smul.addr %s415, 32
        %s417 = scalar_lea.vmem [#allocation5], %s416
        // Predicated region
        $region57: #{tpu_custom_call.1} parent=51 // pred_check
          %p418 = pneg %p91
        $region58: #{tpu_custom_call.1} parent=51 // pred_check_branch
          %420 = sbr.rel (%p418) target = $region60
        $region59: #{tpu_custom_call.1} parent=51 // pred_region
          %422 = dma.done %s414, 512
        $region60: #{tpu_custom_call.1} parent=51 // pred_fallthru
          _
        %s423 = sand.u32 %s30, 1
        %s424 = scalar_lea.sflag [#allocation6], %s423
        %s425 = sand.u32 %s104, 1
        %s426 = smul.addr %s425, 32
        %s427 = scalar_lea.vmem [#allocation7], %s426
        // Predicated region
        $region61: #{tpu_custom_call.1} parent=51 // pred_check
          %p428 = pneg %p117
        $region62: #{tpu_custom_call.1} parent=51 // pred_check_branch
          %430 = sbr.rel (%p428) target = $region64
        $region63: #{tpu_custom_call.1} parent=51 // pred_region
          %432 = dma.done %s424, 512
        $region64: #{tpu_custom_call.1} parent=51 // pred_fallthru
          _
        // Predicated region
        $region65: #{tpu_custom_call.1} parent=51 // pred_check
          %p433 = pneg %p138
        $region66: #{tpu_custom_call.1} parent=51 // pred_check_branch
          %435 = sbr.rel (%p433) target = $region68
        $region67: #{tpu_custom_call.1} parent=51 // pred_region
          %437 = dma.done [#allocation9], 2048
        $region68: #{tpu_custom_call.1} parent=51 // pred_fallthru
          _
        // Predicated region
        $region69: #{tpu_custom_call.1} parent=51 // pred_check
          %p438 = pneg %p159
        $region70: #{tpu_custom_call.1} parent=51 // pred_check_branch
          %440 = sbr.rel (%p438) target = $region72
        $region71: #{tpu_custom_call.1} parent=51 // pred_region
          %442 = dma.done [#allocation9], 1536
        $region72: #{tpu_custom_call.1} parent=51 // pred_fallthru
          _
        // Predicated region
        $region73: #{tpu_custom_call.1} parent=51 // pred_check
          %p443 = pneg %p180
        $region74: #{tpu_custom_call.1} parent=51 // pred_check_branch
          %445 = sbr.rel (%p443) target = $region76
        $region75: #{tpu_custom_call.1} parent=51 // pred_region
          %447 = dma.done [#allocation12], 1536
        $region76: #{tpu_custom_call.1} parent=51 // pred_fallthru
          _
        // Predicated region
        $region77: #{tpu_custom_call.1} parent=51 // pred_check
          %p448 = pneg %p201
        $region78: #{tpu_custom_call.1} parent=51 // pred_check_branch
          %450 = sbr.rel (%p448) target = $region80
        $region79: #{tpu_custom_call.1} parent=51 // pred_region
          %452 = dma.done [#allocation12], 2048
        $region80: #{tpu_custom_call.1} parent=51 // pred_fallthru
          _
        %s453 = sand.u32 %s52, 1
        %s454 = scalar_lea.sflag [#allocation3], %s453
        %s455 = sand.u32 %s52, 1
        %s456 = smul.addr %s455, 64
        %s457 = scalar_lea.vmem [#allocation2], %s456
        %p458 = pneg %p65
        %p459 = pneg %p62
        %s460 = sand.u32 %s30, 1
        %s461 = scalar_lea.sflag [#allocation6], %s460
        %s462 = sand.u32 %s78, 1
        %s463 = smul.addr %s462, 32
        %s464 = scalar_lea.vmem [#allocation5], %s463
        %p465 = pneg %p91
        %p466 = pneg %p88
        %s467 = sand.u32 %s30, 1
        %s468 = scalar_lea.sflag [#allocation6], %s467
        %s469 = sand.u32 %s104, 1
        %s470 = smul.addr %s469, 32
        %s471 = scalar_lea.vmem [#allocation7], %s470
        %p472 = pneg %p117
        %p473 = pneg %p114
        %p474 = pneg %p138
        %p475 = pneg %p135
        %p476 = pneg %p159
        %p477 = pneg %p156
        %p478 = pneg %p180
        %p479 = pneg %p177
        %p480 = pneg %p201
        %p481 = pneg %p198
        %p482 = pneg %p222
        %p483 = pneg %p219
        %p484 = pneg %p250
        %p485 = pneg %p247
        %s486 = sand.u32 %s237, 1
        %s487 = scalar_lea.sflag [#allocation4], %s486
        %s488 = sand.u32 %s237, 1
        %s489 = smul.addr %s488, 64
        %s490 = scalar_lea.vmem [#allocation14], %s489
        %s491 = smul.u32 8, %s35
        %s492 = smul.u32 8, %s35
        %v494 = vld [vmem:[%s407] sm:$0xff]
        %v495 = vld [vmem:[%s407 + $0x8] sm:$0xff]
        %v496 = vld [vmem:[%s407 + $0x10] sm:$0xff]
        %v497 = vld [vmem:[%s407 + $0x18] sm:$0xff]
        %v498 = vld [vmem:[%s407 + $0x20] sm:$0xff]
        %v499 = vld [vmem:[%s407 + $0x28] sm:$0xff]
        %v500 = vld [vmem:[%s407 + $0x30] sm:$0xff]
        %v501 = vld [vmem:[%s407 + $0x38] sm:$0xff]
        %v502 = vpack.c.bf16 %v495, %v494
        %v503 = vpack.c.bf16 %v497, %v496
        %v504 = vpack.c.bf16 %v499, %v498
        %v505 = vpack.c.bf16 %v501, %v500
        %v506 = vld [vmem:[%s417] sm:$0xff]
        %v507 = vld [vmem:[%s417 + $0x8] sm:$0xff]
        %v508 = vld [vmem:[%s417 + $0x10] sm:$0xff]
        %v509 = vld [vmem:[%s417 + $0x18] sm:$0xff]
        %v510 = vpack.c.bf16 %v507, %v506
        %v511 = vpack.c.bf16 %v509, %v508
        %v512 = vld [vmem:[%s427] sm:$0xff]
        %v513 = vld [vmem:[%s427 + $0x8] sm:$0xff]
        %v514 = vld [vmem:[%s427 + $0x10] sm:$0xff]
        %v515 = vld [vmem:[%s427 + $0x18] sm:$0xff]
        %v516 = vpack.c.bf16 %v513, %v512
        %v517 = vpack.c.bf16 %v515, %v514
        %v518 = vld [vmem:[#allocation8] sm:$0xff]
        %v519 = vld [vmem:[#allocation8 + $0x8] sm:$0xff]
        %v520 = vld [vmem:[#allocation8 + $0x10] sm:$0xff]
        %v521 = vld [vmem:[#allocation8 + $0x18] sm:$0xff]
        %v522 = vld [vmem:[#allocation8 + $0x20] sm:$0xff]
        %v523 = vld [vmem:[#allocation8 + $0x28] sm:$0xff]
        %v524 = vld [vmem:[#allocation8 + $0x30] sm:$0xff]
        %v525 = vld [vmem:[#allocation8 + $0x38] sm:$0xff]
        %v526 = vld [vmem:[#allocation8 + $0x40] sm:$0xff]
        %v527 = vld [vmem:[#allocation8 + $0x48] sm:$0xff]
        %v528 = vld [vmem:[#allocation8 + $0x50] sm:$0xff]
        %v529 = vld [vmem:[#allocation8 + $0x58] sm:$0xff]
        %v530 = vld [vmem:[#allocation8 + $0x60] sm:$0xff]
        %v531 = vld [vmem:[#allocation8 + $0x68] sm:$0xff]
        %v532 = vld [vmem:[#allocation8 + $0x70] sm:$0xff]
        %v533 = vld [vmem:[#allocation8 + $0x78] sm:$0xff]
        %v534 = vpack.c.bf16 %v519, %v518
        %v535 = vpack.c.bf16 %v521, %v520
        %v536 = vpack.c.bf16 %v523, %v522
        %v537 = vpack.c.bf16 %v525, %v524
        %v538 = vpack.c.bf16 %v527, %v526
        %v539 = vpack.c.bf16 %v529, %v528
        %v540 = vpack.c.bf16 %v531, %v530
        %v541 = vpack.c.bf16 %v533, %v532
        %542 = vmatpush.bf16.msra.mxu0 %v541
        %543 = vmatpush.bf16.msra.mxu0 %v540
        %544 = vmatpush.bf16.msra.mxu0 %v539
        %545 = vmatpush.bf16.msra.mxu0 %v538
        %546 = vmatpush.bf16.msra.mxu0 %v537
        %547 = vmatpush.bf16.msra.mxu0 %v536
        %548 = vmatpush.bf16.msra.mxu0 %v535
        %549 = vmatpush.bf16.msra.mxu0 %v534
        %550 = vmatmul.bf16.gmra.mxu0 %v502
        %v551 = vpop.f32.mrf.mxu0
        %v552 = vadd.f32 0.0, %v551
        %v553 = vpop.f32.mrf.mxu0
        %v554 = vadd.f32 0.0, %v553
        %555 = vmatmul.bf16.gmra.mxu0 %v503
        %v556 = vpop.f32.mrf.mxu0
        %v557 = vadd.f32 0.0, %v556
        %v558 = vpop.f32.mrf.mxu0
        %v559 = vadd.f32 0.0, %v558
        %560 = vmatmul.bf16.gmra.mxu0 %v504
        %v561 = vpop.f32.mrf.mxu0
        %v562 = vadd.f32 0.0, %v561
        %v563 = vpop.f32.mrf.mxu0
        %v564 = vadd.f32 0.0, %v563
        %565 = vmatmul.bf16.gmra.mxu0 %v505
        %v566 = vpop.f32.mrf.mxu0
        %v567 = vadd.f32 0.0, %v566
        %v568 = vpop.f32.mrf.mxu0
        %v569 = vadd.f32 0.0, %v568
        %570 = vdwg.mxu0
        %v571 = vmul.f32 %v552, 0.17677669
        %v572 = vmul.f32 %v554, 0.17677669
        %v573 = vmul.f32 %v557, 0.17677669
        %v574 = vmul.f32 %v559, 0.17677669
        %v575 = vmul.f32 %v562, 0.17677669
        %v576 = vmul.f32 %v564, 0.17677669
        %v577 = vmul.f32 %v567, 0.17677669
        %v578 = vmul.f32 %v569, 0.17677669
        %v579 = vld [vmem:[#allocation10] sm:$0xff]
        %v580 = vld [vmem:[#allocation10 + $0x8] sm:$0xff]
        %v581 = vld [vmem:[#allocation10 + $0x10] sm:$0xff]
        %v582 = vld [vmem:[#allocation10 + $0x18] sm:$0xff]
        %v583 = vld [vmem:[#allocation10 + $0x20] sm:$0xff]
        %v584 = vld [vmem:[#allocation10 + $0x28] sm:$0xff]
        %v585 = vld [vmem:[#allocation10 + $0x30] sm:$0xff]
        %v586 = vld [vmem:[#allocation10 + $0x38] sm:$0xff]
        %v587 = vld [vmem:[#allocation10 + $0x40] sm:$0xff]
        %v588 = vld [vmem:[#allocation10 + $0x48] sm:$0xff]
        %v589 = vld [vmem:[#allocation10 + $0x50] sm:$0xff]
        %v590 = vld [vmem:[#allocation10 + $0x58] sm:$0xff]
        %v591 = vpack.c.bf16 %v580, %v579
        %v592 = vpack.c.bf16 %v582, %v581
        %v593 = vpack.c.bf16 %v584, %v583
        %v594 = vpack.c.bf16 %v586, %v585
        %v595 = vpack.c.bf16 %v588, %v587
        %v596 = vpack.c.bf16 %v590, %v589
        %vm597 = vcmask 785408
        %v599 = vsel %vm597, %v510, 0
        %v602 = vsel %vm597, %v511, 0
        %604 = vmatpush.bf16.msra.mxu0 0
        %605 = vmatpush.bf16.msra.mxu0 0
        %606 = vmatpush.bf16.msra.mxu0 %v596
        %607 = vmatpush.bf16.msra.mxu0 %v595
        %608 = vmatpush.bf16.msra.mxu0 %v594
        %609 = vmatpush.bf16.msra.mxu0 %v593
        %610 = vmatpush.bf16.msra.mxu0 %v592
        %611 = vmatpush.bf16.msra.mxu0 %v591
        %612 = vmatmul.bf16.gmra.mxu0 %v599
        %v613 = vpop.f32.mrf.mxu0
        %v614 = vadd.f32 0.0, %v613
        %v615 = vpop.f32.mrf.mxu0
        %v616 = vadd.f32 0.0, %v615
        %617 = vmatmul.bf16.gmra.mxu0 %v602
        %v618 = vpop.f32.mrf.mxu0
        %v619 = vadd.f32 0.0, %v618
        %v620 = vpop.f32.mrf.mxu0
        %v621 = vadd.f32 0.0, %v620
        %622 = vdwg.mxu0
        %v623 = vld [vmem:[#allocation11] sm:$0xff]
        %v624 = vld [vmem:[#allocation11 + $0x8] sm:$0xff]
        %v625 = vld [vmem:[#allocation11 + $0x10] sm:$0xff]
        %v626 = vld [vmem:[#allocation11 + $0x18] sm:$0xff]
        %v627 = vld [vmem:[#allocation11 + $0x20] sm:$0xff]
        %v628 = vld [vmem:[#allocation11 + $0x28] sm:$0xff]
        %v629 = vld [vmem:[#allocation11 + $0x30] sm:$0xff]
        %v630 = vld [vmem:[#allocation11 + $0x38] sm:$0xff]
        %v631 = vld [vmem:[#allocation11 + $0x40] sm:$0xff]
        %v632 = vld [vmem:[#allocation11 + $0x48] sm:$0xff]
        %v633 = vld [vmem:[#allocation11 + $0x50] sm:$0xff]
        %v634 = vld [vmem:[#allocation11 + $0x58] sm:$0xff]
        %v635 = vpack.c.bf16 %v624, %v623
        %v636 = vpack.c.bf16 %v626, %v625
        %v637 = vpack.c.bf16 %v628, %v627
        %v638 = vpack.c.bf16 %v630, %v629
        %v639 = vpack.c.bf16 %v632, %v631
        %v640 = vpack.c.bf16 %v634, %v633
        %v642 = vsel %vm597, %v516, 0
        %v645 = vsel %vm597, %v517, 0
        %647 = vmatpush.bf16.msra.mxu0 0
        %648 = vmatpush.bf16.msra.mxu0 0
        %649 = vmatpush.bf16.msra.mxu0 %v640
        %650 = vmatpush.bf16.msra.mxu0 %v639
        %651 = vmatpush.bf16.msra.mxu0 %v638
        %652 = vmatpush.bf16.msra.mxu0 %v637
        %653 = vmatpush.bf16.msra.mxu0 %v636
        %654 = vmatpush.bf16.msra.mxu0 %v635
        %655 = vmatmul.bf16.gmra.mxu0 %v642
        %v656 = vpop.f32.mrf.mxu0
        %v657 = vadd.f32 0.0, %v656
        %v658 = vpop.f32.mrf.mxu0
        %v659 = vadd.f32 0.0, %v658
        %660 = vmatmul.bf16.gmra.mxu0 %v645
        %v661 = vpop.f32.mrf.mxu0
        %v662 = vadd.f32 0.0, %v661
        %v663 = vpop.f32.mrf.mxu0
        %v664 = vadd.f32 0.0, %v663
        %665 = vdwg.mxu0
        %v666 = vpack.c.bf16 %v571, %v571
        %v667 = vpack.c.bf16 %v572, %v572
        %v668 = vpack.c.bf16 %v573, %v573
        %v669 = vpack.c.bf16 %v574, %v574
        %v670 = vpack.c.bf16 %v575, %v575
        %v671 = vpack.c.bf16 %v576, %v576
        %v672 = vpack.c.bf16 %v577, %v577
        %v673 = vpack.c.bf16 %v578, %v578
        %682 = vrot.lane.b32.xlu0 %v666, 96
        %v683 = vpop.permute.xlu0 %682
        %684 = vrot.lane.b32.xlu0 %v667, 96
        %v685 = vpop.permute.xlu0 %684
        %686 = vrot.lane.b32.xlu0 %v668, 96
        %v687 = vpop.permute.xlu0 %686
        %688 = vrot.lane.b32.xlu0 %v669, 96
        %v689 = vpop.permute.xlu0 %688
        %690 = vrot.lane.b32.xlu0 %v670, 96
        %v691 = vpop.permute.xlu0 %690
        %692 = vrot.lane.b32.xlu0 %v671, 96
        %v693 = vpop.permute.xlu0 %692
        %694 = vrot.lane.b32.xlu0 %v672, 96
        %v695 = vpop.permute.xlu0 %694
        %696 = vrot.lane.b32.xlu0 %v673, 96
        %v697 = vpop.permute.xlu0 %696
        %698 = vrot.lane.b32.xlu0 %v666, 64
        %v699 = vpop.permute.xlu0 %698
        %700 = vrot.lane.b32.xlu0 %v667, 64
        %v701 = vpop.permute.xlu0 %700
        %702 = vrot.lane.b32.xlu0 %v668, 64
        %v703 = vpop.permute.xlu0 %702
        %704 = vrot.lane.b32.xlu0 %v669, 64
        %v705 = vpop.permute.xlu0 %704
        %706 = vrot.lane.b32.xlu0 %v670, 64
        %v707 = vpop.permute.xlu0 %706
        %708 = vrot.lane.b32.xlu0 %v671, 64
        %v709 = vpop.permute.xlu0 %708
        %710 = vrot.lane.b32.xlu0 %v672, 64
        %v711 = vpop.permute.xlu0 %710
        %712 = vrot.lane.b32.xlu0 %v673, 64
        %v713 = vpop.permute.xlu0 %712
        %714 = vrot.lane.b32.xlu0 %v666, 32
        %v715 = vpop.permute.xlu0 %714
        %716 = vrot.lane.b32.xlu0 %v667, 32
        %v717 = vpop.permute.xlu0 %716
        %718 = vrot.lane.b32.xlu0 %v668, 32
        %v719 = vpop.permute.xlu0 %718
        %720 = vrot.lane.b32.xlu0 %v669, 32
        %v721 = vpop.permute.xlu0 %720
        %722 = vrot.lane.b32.xlu0 %v670, 32
        %v723 = vpop.permute.xlu0 %722
        %724 = vrot.lane.b32.xlu0 %v671, 32
        %v725 = vpop.permute.xlu0 %724
        %726 = vrot.lane.b32.xlu0 %v672, 32
        %v727 = vpop.permute.xlu0 %726
        %728 = vrot.lane.b32.xlu0 %v673, 32
        %v729 = vpop.permute.xlu0 %728
        %v730 = vpack.c.bf16 %v614, %v614
        %v731 = vpack.c.bf16 %v616, %v616
        %v732 = vpack.c.bf16 %v619, %v619
        %v733 = vpack.c.bf16 %v621, %v621
        %738 = vrot.lane.b32.xlu0 %v730, 96
        %v739 = vpop.permute.xlu0 %738
        %740 = vrot.lane.b32.xlu0 %v731, 96
        %v741 = vpop.permute.xlu0 %740
        %742 = vrot.lane.b32.xlu0 %v732, 96
        %v743 = vpop.permute.xlu0 %742
        %744 = vrot.lane.b32.xlu0 %v733, 96
        %v745 = vpop.permute.xlu0 %744
        %746 = vrot.lane.b32.xlu0 %v730, 64
        %v747 = vpop.permute.xlu0 %746
        %748 = vrot.lane.b32.xlu0 %v731, 64
        %v749 = vpop.permute.xlu0 %748
        %750 = vrot.lane.b32.xlu0 %v732, 64
        %v751 = vpop.permute.xlu0 %750
        %752 = vrot.lane.b32.xlu0 %v733, 64
        %v753 = vpop.permute.xlu0 %752
        %754 = vrot.lane.b32.xlu0 %v730, 32
        %v755 = vpop.permute.xlu0 %754
        %756 = vrot.lane.b32.xlu0 %v731, 32
        %v757 = vpop.permute.xlu0 %756
        %758 = vrot.lane.b32.xlu0 %v732, 32
        %v759 = vpop.permute.xlu0 %758
        %760 = vrot.lane.b32.xlu0 %v733, 32
        %v761 = vpop.permute.xlu0 %760
        %v762 = vpack.c.bf16 %v657, %v657
        %v763 = vpack.c.bf16 %v659, %v659
        %v764 = vpack.c.bf16 %v662, %v662
        %v765 = vpack.c.bf16 %v664, %v664
        %770 = vrot.lane.b32.xlu0 %v762, 96
        %v771 = vpop.permute.xlu0 %770
        %772 = vrot.lane.b32.xlu0 %v763, 96
        %v773 = vpop.permute.xlu0 %772
        %774 = vrot.lane.b32.xlu0 %v764, 96
        %v775 = vpop.permute.xlu0 %774
        %776 = vrot.lane.b32.xlu0 %v765, 96
        %v777 = vpop.permute.xlu0 %776
        %778 = vrot.lane.b32.xlu0 %v762, 64
        %v779 = vpop.permute.xlu0 %778
        %780 = vrot.lane.b32.xlu0 %v763, 64
        %v781 = vpop.permute.xlu0 %780
        %782 = vrot.lane.b32.xlu0 %v764, 64
        %v783 = vpop.permute.xlu0 %782
        %784 = vrot.lane.b32.xlu0 %v765, 64
        %v785 = vpop.permute.xlu0 %784
        %786 = vrot.lane.b32.xlu0 %v762, 32
        %v787 = vpop.permute.xlu0 %786
        %788 = vrot.lane.b32.xlu0 %v763, 32
        %v789 = vpop.permute.xlu0 %788
        %790 = vrot.lane.b32.xlu0 %v764, 32
        %v791 = vpop.permute.xlu0 %790
        %792 = vrot.lane.b32.xlu0 %v765, 32
        %v793 = vpop.permute.xlu0 %792
        %v794 = vunpack.c.l.b16 %v666
        %v795 = vunpack.c.l.b16 %v667
        %v796 = vunpack.c.l.b16 %v668
        %v797 = vunpack.c.l.b16 %v669
        %v798 = vunpack.c.l.b16 %v670
        %v799 = vunpack.c.l.b16 %v671
        %v800 = vunpack.c.l.b16 %v672
        %v801 = vunpack.c.l.b16 %v673
        %v802 = vpack.c.b16 %v795, %v794
        %v803 = vpack.c.b16 %v797, %v796
        %v804 = vpack.c.b16 %v799, %v798
        %v805 = vpack.c.b16 %v801, %v800
        %v806 = vunpack.c.l.b16 %v730
        %v807 = vunpack.c.l.b16 %v731
        %v808 = vunpack.c.l.b16 %v732
        %v809 = vunpack.c.l.b16 %v733
        %v810 = vpack.c.b16 %v807, %v806
        %v811 = vpack.c.b16 %v809, %v808
        %vm812 = vcmask 261120
        %v814 = vsel %vm812, %v802, 0
        %v817 = vsel %vm812, %v803, 0
        %v820 = vsel %vm812, %v804, 0
        %v823 = vsel %vm812, %v805, 0
        %v826 = vsel %vm812, %v810, 0
        %v829 = vsel %vm812, %v811, 0
        %831 = vmatpush.bf16.xpose.msra.mxu0 0
        %832 = vmatpush.bf16.xpose.msra.mxu0 0
        %833 = vmatpush.bf16.xpose.msra.mxu0 0
        %834 = vmatpush.bf16.xpose.msra.mxu0 0
        %835 = vmatpush.bf16.xpose.msra.mxu0 0
        %836 = vmatpush.bf16.xpose.msra.mxu0 0
        %837 = vmatpush.bf16.xpose.msra.mxu0 %v829
        %838 = vmatpush.bf16.xpose.msra.mxu0 %v826
        %839 = vmatmul.bf16.gmra.mxu0 %v814
        %v840 = vpop.f32.mrf.mxu0
        %v841 = vadd.f32 0.0, %v840
        %v842 = vpop.f32.mrf.mxu0
        %v843 = vadd.f32 0.0, %v842
        %844 = vmatmul.bf16.gmra.mxu0 %v817
        %v845 = vpop.f32.mrf.mxu0
        %v846 = vadd.f32 0.0, %v845
        %v847 = vpop.f32.mrf.mxu0
        %v848 = vadd.f32 0.0, %v847
        %849 = vmatmul.bf16.gmra.mxu0 %v820
        %v850 = vpop.f32.mrf.mxu0
        %v851 = vadd.f32 0.0, %v850
        %v852 = vpop.f32.mrf.mxu0
        %v853 = vadd.f32 0.0, %v852
        %854 = vmatmul.bf16.gmra.mxu0 %v823
        %v855 = vpop.f32.mrf.mxu0
        %v856 = vadd.f32 0.0, %v855
        %v857 = vpop.f32.mrf.mxu0
        %v858 = vadd.f32 0.0, %v857
        %859 = vdwg.mxu0
        %v860 = vunpack.c.l.b16 %v683
        %v861 = vunpack.c.l.b16 %v685
        %v862 = vunpack.c.l.b16 %v687
        %v863 = vunpack.c.l.b16 %v689
        %v864 = vunpack.c.l.b16 %v691
        %v865 = vunpack.c.l.b16 %v693
        %v866 = vunpack.c.l.b16 %v695
        %v867 = vunpack.c.l.b16 %v697
        %v868 = vpack.c.b16 %v861, %v860
        %v869 = vpack.c.b16 %v863, %v862
        %v870 = vpack.c.b16 %v865, %v864
        %v871 = vpack.c.b16 %v867, %v866
        %v872 = vunpack.c.l.b16 %v739
        %v873 = vunpack.c.l.b16 %v741
        %v874 = vunpack.c.l.b16 %v743
        %v875 = vunpack.c.l.b16 %v745
        %v876 = vpack.c.b16 %v873, %v872
        %v877 = vpack.c.b16 %v875, %v874
        %v879 = vsel %vm812, %v868, 0
        %v882 = vsel %vm812, %v869, 0
        %v885 = vsel %vm812, %v870, 0
        %v888 = vsel %vm812, %v871, 0
        %v891 = vsel %vm812, %v876, 0
        %v894 = vsel %vm812, %v877, 0
        %896 = vmatpush.bf16.xpose.msra.mxu0 0
        %897 = vmatpush.bf16.xpose.msra.mxu0 0
        %898 = vmatpush.bf16.xpose.msra.mxu0 0
        %899 = vmatpush.bf16.xpose.msra.mxu0 0
        %900 = vmatpush.bf16.xpose.msra.mxu0 0
        %901 = vmatpush.bf16.xpose.msra.mxu0 0
        %902 = vmatpush.bf16.xpose.msra.mxu0 %v894
        %903 = vmatpush.bf16.xpose.msra.mxu0 %v891
        %904 = vmatmul.bf16.gmra.mxu0 %v879
        %v905 = vpop.f32.mrf.mxu0
        %v906 = vadd.f32 0.0, %v905
        %v907 = vpop.f32.mrf.mxu0
        %v908 = vadd.f32 0.0, %v907
        %909 = vmatmul.bf16.gmra.mxu0 %v882
        %v910 = vpop.f32.mrf.mxu0
        %v911 = vadd.f32 0.0, %v910
        %v912 = vpop.f32.mrf.mxu0
        %v913 = vadd.f32 0.0, %v912
        %914 = vmatmul.bf16.gmra.mxu0 %v885
        %v915 = vpop.f32.mrf.mxu0
        %v916 = vadd.f32 0.0, %v915
        %v917 = vpop.f32.mrf.mxu0
        %v918 = vadd.f32 0.0, %v917
        %919 = vmatmul.bf16.gmra.mxu0 %v888
        %v920 = vpop.f32.mrf.mxu0
        %v921 = vadd.f32 0.0, %v920
        %v922 = vpop.f32.mrf.mxu0
        %v923 = vadd.f32 0.0, %v922
        %924 = vdwg.mxu0
        %v925 = vunpack.c.l.b16 %v699
        %v926 = vunpack.c.l.b16 %v701
        %v927 = vunpack.c.l.b16 %v703
        %v928 = vunpack.c.l.b16 %v705
        %v929 = vunpack.c.l.b16 %v707
        %v930 = vunpack.c.l.b16 %v709
        %v931 = vunpack.c.l.b16 %v711
        %v932 = vunpack.c.l.b16 %v713
        %v933 = vpack.c.b16 %v926, %v925
        %v934 = vpack.c.b16 %v928, %v927
        %v935 = vpack.c.b16 %v930, %v929
        %v936 = vpack.c.b16 %v932, %v931
        %v937 = vunpack.c.l.b16 %v747
        %v938 = vunpack.c.l.b16 %v749
        %v939 = vunpack.c.l.b16 %v751
        %v940 = vunpack.c.l.b16 %v753
        %v941 = vpack.c.b16 %v938, %v937
        %v942 = vpack.c.b16 %v940, %v939
        %v944 = vsel %vm812, %v933, 0
        %v947 = vsel %vm812, %v934, 0
        %v950 = vsel %vm812, %v935, 0
        %v953 = vsel %vm812, %v936, 0
        %v956 = vsel %vm812, %v941, 0
        %v959 = vsel %vm812, %v942, 0
        %961 = vmatpush.bf16.xpose.msra.mxu0 0
        %962 = vmatpush.bf16.xpose.msra.mxu0 0
        %963 = vmatpush.bf16.xpose.msra.mxu0 0
        %964 = vmatpush.bf16.xpose.msra.mxu0 0
        %965 = vmatpush.bf16.xpose.msra.mxu0 0
        %966 = vmatpush.bf16.xpose.msra.mxu0 0
        %967 = vmatpush.bf16.xpose.msra.mxu0 %v959
        %968 = vmatpush.bf16.xpose.msra.mxu0 %v956
        %969 = vmatmul.bf16.gmra.mxu0 %v944
        %v970 = vpop.f32.mrf.mxu0
        %v971 = vadd.f32 0.0, %v970
        %v972 = vpop.f32.mrf.mxu0
        %v973 = vadd.f32 0.0, %v972
        %974 = vmatmul.bf16.gmra.mxu0 %v947
        %v975 = vpop.f32.mrf.mxu0
        %v976 = vadd.f32 0.0, %v975
        %v977 = vpop.f32.mrf.mxu0
        %v978 = vadd.f32 0.0, %v977
        %979 = vmatmul.bf16.gmra.mxu0 %v950
        %v980 = vpop.f32.mrf.mxu0
        %v981 = vadd.f32 0.0, %v980
        %v982 = vpop.f32.mrf.mxu0
        %v983 = vadd.f32 0.0, %v982
        %984 = vmatmul.bf16.gmra.mxu0 %v953
        %v985 = vpop.f32.mrf.mxu0
        %v986 = vadd.f32 0.0, %v985
        %v987 = vpop.f32.mrf.mxu0
        %v988 = vadd.f32 0.0, %v987
        %989 = vdwg.mxu0
        %v990 = vunpack.c.l.b16 %v715
        %v991 = vunpack.c.l.b16 %v717
        %v992 = vunpack.c.l.b16 %v719
        %v993 = vunpack.c.l.b16 %v721
        %v994 = vunpack.c.l.b16 %v723
        %v995 = vunpack.c.l.b16 %v725
        %v996 = vunpack.c.l.b16 %v727
        %v997 = vunpack.c.l.b16 %v729
        %v998 = vpack.c.b16 %v991, %v990
        %v999 = vpack.c.b16 %v993, %v992
        %v1000 = vpack.c.b16 %v995, %v994
        %v1001 = vpack.c.b16 %v997, %v996
        %v1002 = vunpack.c.l.b16 %v755
        %v1003 = vunpack.c.l.b16 %v757
        %v1004 = vunpack.c.l.b16 %v759
        %v1005 = vunpack.c.l.b16 %v761
        %v1006 = vpack.c.b16 %v1003, %v1002
        %v1007 = vpack.c.b16 %v1005, %v1004
        %v1009 = vsel %vm812, %v998, 0
        %v1012 = vsel %vm812, %v999, 0
        %v1015 = vsel %vm812, %v1000, 0
        %v1018 = vsel %vm812, %v1001, 0
        %v1021 = vsel %vm812, %v1006, 0
        %v1024 = vsel %vm812, %v1007, 0
        %1026 = vmatpush.bf16.xpose.msra.mxu0 0
        %1027 = vmatpush.bf16.xpose.msra.mxu0 0
        %1028 = vmatpush.bf16.xpose.msra.mxu0 0
        %1029 = vmatpush.bf16.xpose.msra.mxu0 0
        %1030 = vmatpush.bf16.xpose.msra.mxu0 0
        %1031 = vmatpush.bf16.xpose.msra.mxu0 0
        %1032 = vmatpush.bf16.xpose.msra.mxu0 %v1024
        %1033 = vmatpush.bf16.xpose.msra.mxu0 %v1021
        %1034 = vmatmul.bf16.gmra.mxu0 %v1009
        %v1035 = vpop.f32.mrf.mxu0
        %v1036 = vadd.f32 0.0, %v1035
        %v1037 = vpop.f32.mrf.mxu0
        %v1038 = vadd.f32 0.0, %v1037
        %1039 = vmatmul.bf16.gmra.mxu0 %v1012
        %v1040 = vpop.f32.mrf.mxu0
        %v1041 = vadd.f32 0.0, %v1040
        %v1042 = vpop.f32.mrf.mxu0
        %v1043 = vadd.f32 0.0, %v1042
        %1044 = vmatmul.bf16.gmra.mxu0 %v1015
        %v1045 = vpop.f32.mrf.mxu0
        %v1046 = vadd.f32 0.0, %v1045
        %v1047 = vpop.f32.mrf.mxu0
        %v1048 = vadd.f32 0.0, %v1047
        %1049 = vmatmul.bf16.gmra.mxu0 %v1018
        %v1050 = vpop.f32.mrf.mxu0
        %v1051 = vadd.f32 0.0, %v1050
        %v1052 = vpop.f32.mrf.mxu0
        %v1053 = vadd.f32 0.0, %v1052
        %1054 = vdwg.mxu0
        %v1055 = vsel %vm812, %v841, -inf
        %1056 = vmax.xlane.f32.xlu0 %v1055
        %v1057 = vpop.xlane.xlu0 %1056
        %v1058 = vsel %vm812, %v843, -inf
        %1059 = vmax.xlane.f32.xlu0 %v1058
        %v1060 = vpop.xlane.xlu0 %1059
        %v1061 = vsel %vm812, %v846, -inf
        %1062 = vmax.xlane.f32.xlu0 %v1061
        %v1063 = vpop.xlane.xlu0 %1062
        %v1064 = vsel %vm812, %v848, -inf
        %1065 = vmax.xlane.f32.xlu0 %v1064
        %v1066 = vpop.xlane.xlu0 %1065
        %v1067 = vsel %vm812, %v851, -inf
        %1068 = vmax.xlane.f32.xlu0 %v1067
        %v1069 = vpop.xlane.xlu0 %1068
        %v1070 = vsel %vm812, %v853, -inf
        %1071 = vmax.xlane.f32.xlu0 %v1070
        %v1072 = vpop.xlane.xlu0 %1071
        %v1073 = vsel %vm812, %v856, -inf
        %1074 = vmax.xlane.f32.xlu0 %v1073
        %v1075 = vpop.xlane.xlu0 %1074
        %v1076 = vsel %vm812, %v858, -inf
        %1077 = vmax.xlane.f32.xlu0 %v1076
        %v1078 = vpop.xlane.xlu0 %1077
        %v1079 = vsel %vm812, %v906, -inf
        %1080 = vmax.xlane.f32.xlu0 %v1079
        %v1081 = vpop.xlane.xlu0 %1080
        %v1082 = vsel %vm812, %v908, -inf
        %1083 = vmax.xlane.f32.xlu0 %v1082
        %v1084 = vpop.xlane.xlu0 %1083
        %v1085 = vsel %vm812, %v911, -inf
        %1086 = vmax.xlane.f32.xlu0 %v1085
        %v1087 = vpop.xlane.xlu0 %1086
        %v1088 = vsel %vm812, %v913, -inf
        %1089 = vmax.xlane.f32.xlu0 %v1088
        %v1090 = vpop.xlane.xlu0 %1089
        %v1091 = vsel %vm812, %v916, -inf
        %1092 = vmax.xlane.f32.xlu0 %v1091
        %v1093 = vpop.xlane.xlu0 %1092
        %v1094 = vsel %vm812, %v918, -inf
        %1095 = vmax.xlane.f32.xlu0 %v1094
        %v1096 = vpop.xlane.xlu0 %1095
        %v1097 = vsel %vm812, %v921, -inf
        %1098 = vmax.xlane.f32.xlu0 %v1097
        %v1099 = vpop.xlane.xlu0 %1098
        %v1100 = vsel %vm812, %v923, -inf
        %1101 = vmax.xlane.f32.xlu0 %v1100
        %v1102 = vpop.xlane.xlu0 %1101
        %v1103 = vsel %vm812, %v971, -inf
        %1104 = vmax.xlane.f32.xlu0 %v1103
        %v1105 = vpop.xlane.xlu0 %1104
        %v1106 = vsel %vm812, %v973, -inf
        %1107 = vmax.xlane.f32.xlu0 %v1106
        %v1108 = vpop.xlane.xlu0 %1107
        %v1109 = vsel %vm812, %v976, -inf
        %1110 = vmax.xlane.f32.xlu0 %v1109
        %v1111 = vpop.xlane.xlu0 %1110
        %v1112 = vsel %vm812, %v978, -inf
        %1113 = vmax.xlane.f32.xlu0 %v1112
        %v1114 = vpop.xlane.xlu0 %1113
        %v1115 = vsel %vm812, %v981, -inf
        %1116 = vmax.xlane.f32.xlu0 %v1115
        %v1117 = vpop.xlane.xlu0 %1116
        %v1118 = vsel %vm812, %v983, -inf
        %1119 = vmax.xlane.f32.xlu0 %v1118
        %v1120 = vpop.xlane.xlu0 %1119
        %v1121 = vsel %vm812, %v986, -inf
        %1122 = vmax.xlane.f32.xlu0 %v1121
        %v1123 = vpop.xlane.xlu0 %1122
        %v1124 = vsel %vm812, %v988, -inf
        %1125 = vmax.xlane.f32.xlu0 %v1124
        %v1126 = vpop.xlane.xlu0 %1125
        %v1127 = vsel %vm812, %v1036, -inf
        %1128 = vmax.xlane.f32.xlu0 %v1127
        %v1129 = vpop.xlane.xlu0 %1128
        %v1130 = vsel %vm812, %v1038, -inf
        %1131 = vmax.xlane.f32.xlu0 %v1130
        %v1132 = vpop.xlane.xlu0 %1131
        %v1133 = vsel %vm812, %v1041, -inf
        %1134 = vmax.xlane.f32.xlu0 %v1133
        %v1135 = vpop.xlane.xlu0 %1134
        %v1136 = vsel %vm812, %v1043, -inf
        %1137 = vmax.xlane.f32.xlu0 %v1136
        %v1138 = vpop.xlane.xlu0 %1137
        %v1139 = vsel %vm812, %v1046, -inf
        %1140 = vmax.xlane.f32.xlu0 %v1139
        %v1141 = vpop.xlane.xlu0 %1140
        %v1142 = vsel %vm812, %v1048, -inf
        %1143 = vmax.xlane.f32.xlu0 %v1142
        %v1144 = vpop.xlane.xlu0 %1143
        %v1145 = vsel %vm812, %v1051, -inf
        %1146 = vmax.xlane.f32.xlu0 %v1145
        %v1147 = vpop.xlane.xlu0 %1146
        %v1148 = vsel %vm812, %v1053, -inf
        %1149 = vmax.xlane.f32.xlu0 %v1148
        %v1150 = vpop.xlane.xlu0 %1149
        %v1151 = vsub.f32 %v841, %v1057
        %v1152 = vsub.f32 %v843, %v1060
        %v1153 = vsub.f32 %v846, %v1063
        %v1154 = vsub.f32 %v848, %v1066
        %v1155 = vsub.f32 %v851, %v1069
        %v1156 = vsub.f32 %v853, %v1072
        %v1157 = vsub.f32 %v856, %v1075
        %v1158 = vsub.f32 %v858, %v1078
        %v1159 = vsub.f32 %v906, %v1081
        %v1160 = vsub.f32 %v908, %v1084
        %v1161 = vsub.f32 %v911, %v1087
        %v1162 = vsub.f32 %v913, %v1090
        %v1163 = vsub.f32 %v916, %v1093
        %v1164 = vsub.f32 %v918, %v1096
        %v1165 = vsub.f32 %v921, %v1099
        %v1166 = vsub.f32 %v923, %v1102
        %v1167 = vsub.f32 %v971, %v1105
        %v1168 = vsub.f32 %v973, %v1108
        %v1169 = vsub.f32 %v976, %v1111
        %v1170 = vsub.f32 %v978, %v1114
        %v1171 = vsub.f32 %v981, %v1117
        %v1172 = vsub.f32 %v983, %v1120
        %v1173 = vsub.f32 %v986, %v1123
        %v1174 = vsub.f32 %v988, %v1126
        %v1175 = vsub.f32 %v1036, %v1129
        %v1176 = vsub.f32 %v1038, %v1132
        %v1177 = vsub.f32 %v1041, %v1135
        %v1178 = vsub.f32 %v1043, %v1138
        %v1179 = vsub.f32 %v1046, %v1141
        %v1180 = vsub.f32 %v1048, %v1144
        %v1181 = vsub.f32 %v1051, %v1147
        %v1182 = vsub.f32 %v1053, %v1150
        %v1183 = vmul.f32 %v1151, 1.442695
        %v1184 = vpow.pop %v1183
        %v1185 = vmul.f32 %v1152, 1.442695
        %v1186 = vpow.pop %v1185
        %v1187 = vmul.f32 %v1153, 1.442695
        %v1188 = vpow.pop %v1187
        %v1189 = vmul.f32 %v1154, 1.442695
        %v1190 = vpow.pop %v1189
        %v1191 = vmul.f32 %v1155, 1.442695
        %v1192 = vpow.pop %v1191
        %v1193 = vmul.f32 %v1156, 1.442695
        %v1194 = vpow.pop %v1193
        %v1195 = vmul.f32 %v1157, 1.442695
        %v1196 = vpow.pop %v1195
        %v1197 = vmul.f32 %v1158, 1.442695
        %v1198 = vpow.pop %v1197
        %v1199 = vmul.f32 %v1159, 1.442695
        %v1200 = vpow.pop %v1199
        %v1201 = vmul.f32 %v1160, 1.442695
        %v1202 = vpow.pop %v1201
        %v1203 = vmul.f32 %v1161, 1.442695
        %v1204 = vpow.pop %v1203
        %v1205 = vmul.f32 %v1162, 1.442695
        %v1206 = vpow.pop %v1205
        %v1207 = vmul.f32 %v1163, 1.442695
        %v1208 = vpow.pop %v1207
        %v1209 = vmul.f32 %v1164, 1.442695
        %v1210 = vpow.pop %v1209
        %v1211 = vmul.f32 %v1165, 1.442695
        %v1212 = vpow.pop %v1211
        %v1213 = vmul.f32 %v1166, 1.442695
        %v1214 = vpow.pop %v1213
        %v1215 = vmul.f32 %v1167, 1.442695
        %v1216 = vpow.pop %v1215
        %v1217 = vmul.f32 %v1168, 1.442695
        %v1218 = vpow.pop %v1217
        %v1219 = vmul.f32 %v1169, 1.442695
        %v1220 = vpow.pop %v1219
        %v1221 = vmul.f32 %v1170, 1.442695
        %v1222 = vpow.pop %v1221
        %v1223 = vmul.f32 %v1171, 1.442695
        %v1224 = vpow.pop %v1223
        %v1225 = vmul.f32 %v1172, 1.442695
        %v1226 = vpow.pop %v1225
        %v1227 = vmul.f32 %v1173, 1.442695
        %v1228 = vpow.pop %v1227
        %v1229 = vmul.f32 %v1174, 1.442695
        %v1230 = vpow.pop %v1229
        %v1231 = vmul.f32 %v1175, 1.442695
        %v1232 = vpow.pop %v1231
        %v1233 = vmul.f32 %v1176, 1.442695
        %v1234 = vpow.pop %v1233
        %v1235 = vmul.f32 %v1177, 1.442695
        %v1236 = vpow.pop %v1235
        %v1237 = vmul.f32 %v1178, 1.442695
        %v1238 = vpow.pop %v1237
        %v1239 = vmul.f32 %v1179, 1.442695
        %v1240 = vpow.pop %v1239
        %v1241 = vmul.f32 %v1180, 1.442695
        %v1242 = vpow.pop %v1241
        %v1243 = vmul.f32 %v1181, 1.442695
        %v1244 = vpow.pop %v1243
        %v1245 = vmul.f32 %v1182, 1.442695
        %v1246 = vpow.pop %v1245
        %v1247 = vsel %vm812, %v1184, 0.0
        %1248 = vadd.xlane.f32.xlu0 %v1247
        %v1249 = vpop.xlane.xlu0 %1248
        %v1250 = vsel %vm812, %v1186, 0.0
        %1251 = vadd.xlane.f32.xlu0 %v1250
        %v1252 = vpop.xlane.xlu0 %1251
        %v1253 = vsel %vm812, %v1188, 0.0
        %1254 = vadd.xlane.f32.xlu0 %v1253
        %v1255 = vpop.xlane.xlu0 %1254
        %v1256 = vsel %vm812, %v1190, 0.0
        %1257 = vadd.xlane.f32.xlu0 %v1256
        %v1258 = vpop.xlane.xlu0 %1257
        %v1259 = vsel %vm812, %v1192, 0.0
        %1260 = vadd.xlane.f32.xlu0 %v1259
        %v1261 = vpop.xlane.xlu0 %1260
        %v1262 = vsel %vm812, %v1194, 0.0
        %1263 = vadd.xlane.f32.xlu0 %v1262
        %v1264 = vpop.xlane.xlu0 %1263
        %v1265 = vsel %vm812, %v1196, 0.0
        %1266 = vadd.xlane.f32.xlu0 %v1265
        %v1267 = vpop.xlane.xlu0 %1266
        %v1268 = vsel %vm812, %v1198, 0.0
        %1269 = vadd.xlane.f32.xlu0 %v1268
        %v1270 = vpop.xlane.xlu0 %1269
        %v1271 = vsel %vm812, %v1200, 0.0
        %1272 = vadd.xlane.f32.xlu0 %v1271
        %v1273 = vpop.xlane.xlu0 %1272
        %v1274 = vsel %vm812, %v1202, 0.0
        %1275 = vadd.xlane.f32.xlu0 %v1274
        %v1276 = vpop.xlane.xlu0 %1275
        %v1277 = vsel %vm812, %v1204, 0.0
        %1278 = vadd.xlane.f32.xlu0 %v1277
        %v1279 = vpop.xlane.xlu0 %1278
        %v1280 = vsel %vm812, %v1206, 0.0
        %1281 = vadd.xlane.f32.xlu0 %v1280
        %v1282 = vpop.xlane.xlu0 %1281
        %v1283 = vsel %vm812, %v1208, 0.0
        %1284 = vadd.xlane.f32.xlu0 %v1283
        %v1285 = vpop.xlane.xlu0 %1284
        %v1286 = vsel %vm812, %v1210, 0.0
        %1287 = vadd.xlane.f32.xlu0 %v1286
        %v1288 = vpop.xlane.xlu0 %1287
        %v1289 = vsel %vm812, %v1212, 0.0
        %1290 = vadd.xlane.f32.xlu0 %v1289
        %v1291 = vpop.xlane.xlu0 %1290
        %v1292 = vsel %vm812, %v1214, 0.0
        %1293 = vadd.xlane.f32.xlu0 %v1292
        %v1294 = vpop.xlane.xlu0 %1293
        %v1295 = vsel %vm812, %v1216, 0.0
        %1296 = vadd.xlane.f32.xlu0 %v1295
        %v1297 = vpop.xlane.xlu0 %1296
        %v1298 = vsel %vm812, %v1218, 0.0
        %1299 = vadd.xlane.f32.xlu0 %v1298
        %v1300 = vpop.xlane.xlu0 %1299
        %v1301 = vsel %vm812, %v1220, 0.0
        %1302 = vadd.xlane.f32.xlu0 %v1301
        %v1303 = vpop.xlane.xlu0 %1302
        %v1304 = vsel %vm812, %v1222, 0.0
        %1305 = vadd.xlane.f32.xlu0 %v1304
        %v1306 = vpop.xlane.xlu0 %1305
        %v1307 = vsel %vm812, %v1224, 0.0
        %1308 = vadd.xlane.f32.xlu0 %v1307
        %v1309 = vpop.xlane.xlu0 %1308
        %v1310 = vsel %vm812, %v1226, 0.0
        %1311 = vadd.xlane.f32.xlu0 %v1310
        %v1312 = vpop.xlane.xlu0 %1311
        %v1313 = vsel %vm812, %v1228, 0.0
        %1314 = vadd.xlane.f32.xlu0 %v1313
        %v1315 = vpop.xlane.xlu0 %1314
        %v1316 = vsel %vm812, %v1230, 0.0
        %1317 = vadd.xlane.f32.xlu0 %v1316
        %v1318 = vpop.xlane.xlu0 %1317
        %v1319 = vsel %vm812, %v1232, 0.0
        %1320 = vadd.xlane.f32.xlu0 %v1319
        %v1321 = vpop.xlane.xlu0 %1320
        %v1322 = vsel %vm812, %v1234, 0.0
        %1323 = vadd.xlane.f32.xlu0 %v1322
        %v1324 = vpop.xlane.xlu0 %1323
        %v1325 = vsel %vm812, %v1236, 0.0
        %1326 = vadd.xlane.f32.xlu0 %v1325
        %v1327 = vpop.xlane.xlu0 %1326
        %v1328 = vsel %vm812, %v1238, 0.0
        %1329 = vadd.xlane.f32.xlu0 %v1328
        %v1330 = vpop.xlane.xlu0 %1329
        %v1331 = vsel %vm812, %v1240, 0.0
        %1332 = vadd.xlane.f32.xlu0 %v1331
        %v1333 = vpop.xlane.xlu0 %1332
        %v1334 = vsel %vm812, %v1242, 0.0
        %1335 = vadd.xlane.f32.xlu0 %v1334
        %v1336 = vpop.xlane.xlu0 %1335
        %v1337 = vsel %vm812, %v1244, 0.0
        %1338 = vadd.xlane.f32.xlu0 %v1337
        %v1339 = vpop.xlane.xlu0 %1338
        %v1340 = vsel %vm812, %v1246, 0.0
        %1341 = vadd.xlane.f32.xlu0 %v1340
        %v1342 = vpop.xlane.xlu0 %1341
        %v1343 = vrcp.pop %v1249
        %v1344 = vrcp.pop %v1252
        %v1345 = vrcp.pop %v1255
        %v1346 = vrcp.pop %v1258
        %v1347 = vrcp.pop %v1261
        %v1348 = vrcp.pop %v1264
        %v1349 = vrcp.pop %v1267
        %v1350 = vrcp.pop %v1270
        %v1351 = vrcp.pop %v1273
        %v1352 = vrcp.pop %v1276
        %v1353 = vrcp.pop %v1279
        %v1354 = vrcp.pop %v1282
        %v1355 = vrcp.pop %v1285
        %v1356 = vrcp.pop %v1288
        %v1357 = vrcp.pop %v1291
        %v1358 = vrcp.pop %v1294
        %v1359 = vrcp.pop %v1297
        %v1360 = vrcp.pop %v1300
        %v1361 = vrcp.pop %v1303
        %v1362 = vrcp.pop %v1306
        %v1363 = vrcp.pop %v1309
        %v1364 = vrcp.pop %v1312
        %v1365 = vrcp.pop %v1315
        %v1366 = vrcp.pop %v1318
        %v1367 = vrcp.pop %v1321
        %v1368 = vrcp.pop %v1324
        %v1369 = vrcp.pop %v1327
        %v1370 = vrcp.pop %v1330
        %v1371 = vrcp.pop %v1333
        %v1372 = vrcp.pop %v1336
        %v1373 = vrcp.pop %v1339
        %v1374 = vrcp.pop %v1342
        %v1375 = vmul.f32 %v1184, %v1343
        %v1376 = vmul.f32 %v1186, %v1344
        %v1377 = vmul.f32 %v1188, %v1345
        %v1378 = vmul.f32 %v1190, %v1346
        %v1379 = vmul.f32 %v1192, %v1347
        %v1380 = vmul.f32 %v1194, %v1348
        %v1381 = vmul.f32 %v1196, %v1349
        %v1382 = vmul.f32 %v1198, %v1350
        %v1383 = vmul.f32 %v1200, %v1351
        %v1384 = vmul.f32 %v1202, %v1352
        %v1385 = vmul.f32 %v1204, %v1353
        %v1386 = vmul.f32 %v1206, %v1354
        %v1387 = vmul.f32 %v1208, %v1355
        %v1388 = vmul.f32 %v1210, %v1356
        %v1389 = vmul.f32 %v1212, %v1357
        %v1390 = vmul.f32 %v1214, %v1358
        %v1391 = vmul.f32 %v1216, %v1359
        %v1392 = vmul.f32 %v1218, %v1360
        %v1393 = vmul.f32 %v1220, %v1361
        %v1394 = vmul.f32 %v1222, %v1362
        %v1395 = vmul.f32 %v1224, %v1363
        %v1396 = vmul.f32 %v1226, %v1364
        %v1397 = vmul.f32 %v1228, %v1365
        %v1398 = vmul.f32 %v1230, %v1366
        %v1399 = vmul.f32 %v1232, %v1367
        %v1400 = vmul.f32 %v1234, %v1368
        %v1401 = vmul.f32 %v1236, %v1369
        %v1402 = vmul.f32 %v1238, %v1370
        %v1403 = vmul.f32 %v1240, %v1371
        %v1404 = vmul.f32 %v1242, %v1372
        %v1405 = vmul.f32 %v1244, %v1373
        %v1406 = vmul.f32 %v1246, %v1374
        %v1407 = vpack.c.bf16 %v1375, %v1375
        %v1408 = vpack.c.bf16 %v1376, %v1376
        %v1409 = vpack.c.bf16 %v1377, %v1377
        %v1410 = vpack.c.bf16 %v1378, %v1378
        %v1411 = vpack.c.bf16 %v1379, %v1379
        %v1412 = vpack.c.bf16 %v1380, %v1380
        %v1413 = vpack.c.bf16 %v1381, %v1381
        %v1414 = vpack.c.bf16 %v1382, %v1382
        %v1415 = vpack.c.bf16 %v1383, %v1383
        %v1416 = vpack.c.bf16 %v1384, %v1384
        %v1417 = vpack.c.bf16 %v1385, %v1385
        %v1418 = vpack.c.bf16 %v1386, %v1386
        %v1419 = vpack.c.bf16 %v1387, %v1387
        %v1420 = vpack.c.bf16 %v1388, %v1388
        %v1421 = vpack.c.bf16 %v1389, %v1389
        %v1422 = vpack.c.bf16 %v1390, %v1390
        %v1423 = vpack.c.bf16 %v1391, %v1391
        %v1424 = vpack.c.bf16 %v1392, %v1392
        %v1425 = vpack.c.bf16 %v1393, %v1393
        %v1426 = vpack.c.bf16 %v1394, %v1394
        %v1427 = vpack.c.bf16 %v1395, %v1395
        %v1428 = vpack.c.bf16 %v1396, %v1396
        %v1429 = vpack.c.bf16 %v1397, %v1397
        %v1430 = vpack.c.bf16 %v1398, %v1398
        %v1431 = vpack.c.bf16 %v1399, %v1399
        %v1432 = vpack.c.bf16 %v1400, %v1400
        %v1433 = vpack.c.bf16 %v1401, %v1401
        %v1434 = vpack.c.bf16 %v1402, %v1402
        %v1435 = vpack.c.bf16 %v1403, %v1403
        %v1436 = vpack.c.bf16 %v1404, %v1404
        %v1437 = vpack.c.bf16 %v1405, %v1405
        %v1438 = vpack.c.bf16 %v1406, %v1406
        %v1447 = vunpack.c.l.b16 %v1407
        %v1448 = vunpack.c.l.b16 %v1408
        %v1449 = vunpack.c.l.b16 %v1409
        %v1450 = vunpack.c.l.b16 %v1410
        %v1451 = vunpack.c.l.b16 %v1411
        %v1452 = vunpack.c.l.b16 %v1412
        %v1453 = vunpack.c.l.b16 %v1413
        %v1454 = vunpack.c.l.b16 %v1414
        %v1455 = vpack.c.b16 %v1448, %v1447
        %v1456 = vpack.c.b16 %v1450, %v1449
        %v1457 = vpack.c.b16 %v1452, %v1451
        %v1458 = vpack.c.b16 %v1454, %v1453
        %v1459 = vunpack.c.l.b16 %v762
        %v1460 = vunpack.c.l.b16 %v763
        %v1461 = vunpack.c.l.b16 %v764
        %v1462 = vunpack.c.l.b16 %v765
        %v1463 = vpack.c.b16 %v1460, %v1459
        %v1464 = vpack.c.b16 %v1462, %v1461
        %v1468 = vsel %vm812, %v1455, 0
        %v1471 = vsel %vm812, %v1456, 0
        %v1474 = vsel %vm812, %v1457, 0
        %v1477 = vsel %vm812, %v1458, 0
        %1479 = vmatpush.bf16.msra.mxu0 0
        %1480 = vmatpush.bf16.msra.mxu0 0
        %1481 = vmatpush.bf16.msra.mxu0 0
        %1482 = vmatpush.bf16.msra.mxu0 0
        %1483 = vmatpush.bf16.msra.mxu0 0
        %1484 = vmatpush.bf16.msra.mxu0 0
        %1485 = vmatpush.bf16.msra.mxu0 %v1464
        %1486 = vmatpush.bf16.msra.mxu0 %v1463
        %1487 = vmatmul.bf16.gmra.mxu0 %v1468
        %v1488 = vpop.f32.mrf.mxu0
        %v1489 = vadd.f32 0.0, %v1488
        %v1490 = vpop.f32.mrf.mxu0
        %v1491 = vadd.f32 0.0, %v1490
        %1492 = vmatmul.bf16.gmra.mxu0 %v1471
        %v1493 = vpop.f32.mrf.mxu0
        %v1494 = vadd.f32 0.0, %v1493
        %v1495 = vpop.f32.mrf.mxu0
        %v1496 = vadd.f32 0.0, %v1495
        %1497 = vmatmul.bf16.gmra.mxu0 %v1474
        %v1498 = vpop.f32.mrf.mxu0
        %v1499 = vadd.f32 0.0, %v1498
        %v1500 = vpop.f32.mrf.mxu0
        %v1501 = vadd.f32 0.0, %v1500
        %1502 = vmatmul.bf16.gmra.mxu0 %v1477
        %v1503 = vpop.f32.mrf.mxu0
        %v1504 = vadd.f32 0.0, %v1503
        %v1505 = vpop.f32.mrf.mxu0
        %v1506 = vadd.f32 0.0, %v1505
        %1507 = vdwg.mxu0
        %v1516 = vunpack.c.l.b16 %v1415
        %v1517 = vunpack.c.l.b16 %v1416
        %v1518 = vunpack.c.l.b16 %v1417
        %v1519 = vunpack.c.l.b16 %v1418
        %v1520 = vunpack.c.l.b16 %v1419
        %v1521 = vunpack.c.l.b16 %v1420
        %v1522 = vunpack.c.l.b16 %v1421
        %v1523 = vunpack.c.l.b16 %v1422
        %v1524 = vpack.c.b16 %v1517, %v1516
        %v1525 = vpack.c.b16 %v1519, %v1518
        %v1526 = vpack.c.b16 %v1521, %v1520
        %v1527 = vpack.c.b16 %v1523, %v1522
        %v1528 = vunpack.c.l.b16 %v771
        %v1529 = vunpack.c.l.b16 %v773
        %v1530 = vunpack.c.l.b16 %v775
        %v1531 = vunpack.c.l.b16 %v777
        %v1532 = vpack.c.b16 %v1529, %v1528
        %v1533 = vpack.c.b16 %v1531, %v1530
        %v1537 = vsel %vm812, %v1524, 0
        %v1540 = vsel %vm812, %v1525, 0
        %v1543 = vsel %vm812, %v1526, 0
        %v1546 = vsel %vm812, %v1527, 0
        %1548 = vmatpush.bf16.msra.mxu0 0
        %1549 = vmatpush.bf16.msra.mxu0 0
        %1550 = vmatpush.bf16.msra.mxu0 0
        %1551 = vmatpush.bf16.msra.mxu0 0
        %1552 = vmatpush.bf16.msra.mxu0 0
        %1553 = vmatpush.bf16.msra.mxu0 0
        %1554 = vmatpush.bf16.msra.mxu0 %v1533
        %1555 = vmatpush.bf16.msra.mxu0 %v1532
        %1556 = vmatmul.bf16.gmra.mxu0 %v1537
        %v1557 = vpop.f32.mrf.mxu0
        %v1558 = vadd.f32 0.0, %v1557
        %v1559 = vpop.f32.mrf.mxu0
        %v1560 = vadd.f32 0.0, %v1559
        %1561 = vmatmul.bf16.gmra.mxu0 %v1540
        %v1562 = vpop.f32.mrf.mxu0
        %v1563 = vadd.f32 0.0, %v1562
        %v1564 = vpop.f32.mrf.mxu0
        %v1565 = vadd.f32 0.0, %v1564
        %1566 = vmatmul.bf16.gmra.mxu0 %v1543
        %v1567 = vpop.f32.mrf.mxu0
        %v1568 = vadd.f32 0.0, %v1567
        %v1569 = vpop.f32.mrf.mxu0
        %v1570 = vadd.f32 0.0, %v1569
        %1571 = vmatmul.bf16.gmra.mxu0 %v1546
        %v1572 = vpop.f32.mrf.mxu0
        %v1573 = vadd.f32 0.0, %v1572
        %v1574 = vpop.f32.mrf.mxu0
        %v1575 = vadd.f32 0.0, %v1574
        %1576 = vdwg.mxu0
        %v1585 = vunpack.c.l.b16 %v1423
        %v1586 = vunpack.c.l.b16 %v1424
        %v1587 = vunpack.c.l.b16 %v1425
        %v1588 = vunpack.c.l.b16 %v1426
        %v1589 = vunpack.c.l.b16 %v1427
        %v1590 = vunpack.c.l.b16 %v1428
        %v1591 = vunpack.c.l.b16 %v1429
        %v1592 = vunpack.c.l.b16 %v1430
        %v1593 = vpack.c.b16 %v1586, %v1585
        %v1594 = vpack.c.b16 %v1588, %v1587
        %v1595 = vpack.c.b16 %v1590, %v1589
        %v1596 = vpack.c.b16 %v1592, %v1591
        %v1597 = vunpack.c.l.b16 %v779
        %v1598 = vunpack.c.l.b16 %v781
        %v1599 = vunpack.c.l.b16 %v783
        %v1600 = vunpack.c.l.b16 %v785
        %v1601 = vpack.c.b16 %v1598, %v1597
        %v1602 = vpack.c.b16 %v1600, %v1599
        %v1606 = vsel %vm812, %v1593, 0
        %v1609 = vsel %vm812, %v1594, 0
        %v1612 = vsel %vm812, %v1595, 0
        %v1615 = vsel %vm812, %v1596, 0
        %1617 = vmatpush.bf16.msra.mxu0 0
        %1618 = vmatpush.bf16.msra.mxu0 0
        %1619 = vmatpush.bf16.msra.mxu0 0
        %1620 = vmatpush.bf16.msra.mxu0 0
        %1621 = vmatpush.bf16.msra.mxu0 0
        %1622 = vmatpush.bf16.msra.mxu0 0
        %1623 = vmatpush.bf16.msra.mxu0 %v1602
        %1624 = vmatpush.bf16.msra.mxu0 %v1601
        %1625 = vmatmul.bf16.gmra.mxu0 %v1606
        %v1626 = vpop.f32.mrf.mxu0
        %v1627 = vadd.f32 0.0, %v1626
        %v1628 = vpop.f32.mrf.mxu0
        %v1629 = vadd.f32 0.0, %v1628
        %1630 = vmatmul.bf16.gmra.mxu0 %v1609
        %v1631 = vpop.f32.mrf.mxu0
        %v1632 = vadd.f32 0.0, %v1631
        %v1633 = vpop.f32.mrf.mxu0
        %v1634 = vadd.f32 0.0, %v1633
        %1635 = vmatmul.bf16.gmra.mxu0 %v1612
        %v1636 = vpop.f32.mrf.mxu0
        %v1637 = vadd.f32 0.0, %v1636
        %v1638 = vpop.f32.mrf.mxu0
        %v1639 = vadd.f32 0.0, %v1638
        %1640 = vmatmul.bf16.gmra.mxu0 %v1615
        %v1641 = vpop.f32.mrf.mxu0
        %v1642 = vadd.f32 0.0, %v1641
        %v1643 = vpop.f32.mrf.mxu0
        %v1644 = vadd.f32 0.0, %v1643
        %1645 = vdwg.mxu0
        %v1654 = vunpack.c.l.b16 %v1431
        %v1655 = vunpack.c.l.b16 %v1432
        %v1656 = vunpack.c.l.b16 %v1433
        %v1657 = vunpack.c.l.b16 %v1434
        %v1658 = vunpack.c.l.b16 %v1435
        %v1659 = vunpack.c.l.b16 %v1436
        %v1660 = vunpack.c.l.b16 %v1437
        %v1661 = vunpack.c.l.b16 %v1438
        %v1662 = vpack.c.b16 %v1655, %v1654
        %v1663 = vpack.c.b16 %v1657, %v1656
        %v1664 = vpack.c.b16 %v1659, %v1658
        %v1665 = vpack.c.b16 %v1661, %v1660
        %v1666 = vunpack.c.l.b16 %v787
        %v1667 = vunpack.c.l.b16 %v789
        %v1668 = vunpack.c.l.b16 %v791
        %v1669 = vunpack.c.l.b16 %v793
        %v1670 = vpack.c.b16 %v1667, %v1666
        %v1671 = vpack.c.b16 %v1669, %v1668
        %v1675 = vsel %vm812, %v1662, 0
        %v1678 = vsel %vm812, %v1663, 0
        %v1681 = vsel %vm812, %v1664, 0
        %v1684 = vsel %vm812, %v1665, 0
        %1686 = vmatpush.bf16.msra.mxu0 0
        %1687 = vmatpush.bf16.msra.mxu0 0
        %1688 = vmatpush.bf16.msra.mxu0 0
        %1689 = vmatpush.bf16.msra.mxu0 0
        %1690 = vmatpush.bf16.msra.mxu0 0
        %1691 = vmatpush.bf16.msra.mxu0 0
        %1692 = vmatpush.bf16.msra.mxu0 %v1671
        %1693 = vmatpush.bf16.msra.mxu0 %v1670
        %1694 = vmatmul.bf16.gmra.mxu0 %v1675
        %v1695 = vpop.f32.mrf.mxu0
        %v1696 = vadd.f32 0.0, %v1695
        %v1697 = vpop.f32.mrf.mxu0
        %v1698 = vadd.f32 0.0, %v1697
        %1699 = vmatmul.bf16.gmra.mxu0 %v1678
        %v1700 = vpop.f32.mrf.mxu0
        %v1701 = vadd.f32 0.0, %v1700
        %v1702 = vpop.f32.mrf.mxu0
        %v1703 = vadd.f32 0.0, %v1702
        %1704 = vmatmul.bf16.gmra.mxu0 %v1681
        %v1705 = vpop.f32.mrf.mxu0
        %v1706 = vadd.f32 0.0, %v1705
        %v1707 = vpop.f32.mrf.mxu0
        %v1708 = vadd.f32 0.0, %v1707
        %1709 = vmatmul.bf16.gmra.mxu0 %v1684
        %v1710 = vpop.f32.mrf.mxu0
        %v1711 = vadd.f32 0.0, %v1710
        %v1712 = vpop.f32.mrf.mxu0
        %v1713 = vadd.f32 0.0, %v1712
        %1714 = vdwg.mxu0
        %v1715 = vpack.c.bf16 %v1491, %v1489
        %v1716 = vpack.c.bf16 %v1496, %v1494
        %v1717 = vpack.c.bf16 %v1501, %v1499
        %v1718 = vpack.c.bf16 %v1506, %v1504
        %v1719 = vld [vmem:[#allocation13] sm:$0xff]
        %v1720 = vld [vmem:[#allocation13 + $0x8] sm:$0xff]
        %v1721 = vld [vmem:[#allocation13 + $0x10] sm:$0xff]
        %v1722 = vld [vmem:[#allocation13 + $0x18] sm:$0xff]
        %v1723 = vpack.c.bf16 %v1720, %v1719
        %v1724 = vpack.c.bf16 %v1722, %v1721
        %v1725 = vpack.c.bf16 %v1560, %v1558
        %v1726 = vpack.c.bf16 %v1565, %v1563
        %v1727 = vpack.c.bf16 %v1570, %v1568
        %v1728 = vpack.c.bf16 %v1575, %v1573
        %v1729 = vld [vmem:[#allocation13 + $0x20] sm:$0xff]
        %v1730 = vld [vmem:[#allocation13 + $0x28] sm:$0xff]
        %v1731 = vld [vmem:[#allocation13 + $0x30] sm:$0xff]
        %v1732 = vld [vmem:[#allocation13 + $0x38] sm:$0xff]
        %v1733 = vpack.c.bf16 %v1730, %v1729
        %v1734 = vpack.c.bf16 %v1732, %v1731
        %v1736 = vsel %vm812, %v1725, 0
        %v1739 = vsel %vm812, %v1726, 0
        %v1742 = vsel %vm812, %v1727, 0
        %v1745 = vsel %vm812, %v1728, 0
        %1747 = vmatpush.bf16.msra.mxu0 0
        %1748 = vmatpush.bf16.msra.mxu0 0
        %1749 = vmatpush.bf16.msra.mxu0 0
        %1750 = vmatpush.bf16.msra.mxu0 0
        %1751 = vmatpush.bf16.msra.mxu0 0
        %1752 = vmatpush.bf16.msra.mxu0 0
        %1753 = vmatpush.bf16.msra.mxu0 %v1734
        %1754 = vmatpush.bf16.msra.mxu0 %v1733
        %1755 = vmatmul.bf16.gmra.mxu0 %v1736
        %v1756 = vpop.f32.mrf.mxu0
        %v1757 = vadd.f32 0.0, %v1756
        %v1758 = vpop.f32.mrf.mxu0
        %v1759 = vadd.f32 0.0, %v1758
        %1760 = vmatmul.bf16.gmra.mxu0 %v1739
        %v1761 = vpop.f32.mrf.mxu0
        %v1762 = vadd.f32 0.0, %v1761
        %v1763 = vpop.f32.mrf.mxu0
        %v1764 = vadd.f32 0.0, %v1763
        %1765 = vmatmul.bf16.gmra.mxu0 %v1742
        %v1766 = vpop.f32.mrf.mxu0
        %v1767 = vadd.f32 0.0, %v1766
        %v1768 = vpop.f32.mrf.mxu0
        %v1769 = vadd.f32 0.0, %v1768
        %1770 = vmatmul.bf16.gmra.mxu0 %v1745
        %v1771 = vpop.f32.mrf.mxu0
        %v1772 = vadd.f32 0.0, %v1771
        %v1773 = vpop.f32.mrf.mxu0
        %v1774 = vadd.f32 0.0, %v1773
        %1775 = vdwg.mxu0
        %v1777 = vsel %vm812, %v1715, 0
        %v1780 = vsel %vm812, %v1716, 0
        %v1783 = vsel %vm812, %v1717, 0
        %v1786 = vsel %vm812, %v1718, 0
        %1788 = vmatpush.bf16.msra.mxu0 0
        %1789 = vmatpush.bf16.msra.mxu0 0
        %1790 = vmatpush.bf16.msra.mxu0 0
        %1791 = vmatpush.bf16.msra.mxu0 0
        %1792 = vmatpush.bf16.msra.mxu0 0
        %1793 = vmatpush.bf16.msra.mxu0 0
        %1794 = vmatpush.bf16.msra.mxu0 %v1724
        %1795 = vmatpush.bf16.msra.mxu0 %v1723
        %1796 = vmatmul.bf16.gmra.mxu0 %v1777
        %v1797 = vpop.f32.mrf.mxu0
        %v1798 = vadd.f32 %v1757, %v1797
        %v1799 = vpop.f32.mrf.mxu0
        %v1800 = vadd.f32 %v1759, %v1799
        %1801 = vmatmul.bf16.gmra.mxu0 %v1780
        %v1802 = vpop.f32.mrf.mxu0
        %v1803 = vadd.f32 %v1762, %v1802
        %v1804 = vpop.f32.mrf.mxu0
        %v1805 = vadd.f32 %v1764, %v1804
        %1806 = vmatmul.bf16.gmra.mxu0 %v1783
        %v1807 = vpop.f32.mrf.mxu0
        %v1808 = vadd.f32 %v1767, %v1807
        %v1809 = vpop.f32.mrf.mxu0
        %v1810 = vadd.f32 %v1769, %v1809
        %1811 = vmatmul.bf16.gmra.mxu0 %v1786
        %v1812 = vpop.f32.mrf.mxu0
        %v1813 = vadd.f32 %v1772, %v1812
        %v1814 = vpop.f32.mrf.mxu0
        %v1815 = vadd.f32 %v1774, %v1814
        %1816 = vdwg.mxu0
        %v1817 = vpack.c.bf16 %v1629, %v1627
        %v1818 = vpack.c.bf16 %v1634, %v1632
        %v1819 = vpack.c.bf16 %v1639, %v1637
        %v1820 = vpack.c.bf16 %v1644, %v1642
        %v1821 = vld [vmem:[#allocation13 + $0x40] sm:$0xff]
        %v1822 = vld [vmem:[#allocation13 + $0x48] sm:$0xff]
        %v1823 = vld [vmem:[#allocation13 + $0x50] sm:$0xff]
        %v1824 = vld [vmem:[#allocation13 + $0x58] sm:$0xff]
        %v1825 = vpack.c.bf16 %v1822, %v1821
        %v1826 = vpack.c.bf16 %v1824, %v1823
        %v1828 = vsel %vm812, %v1817, 0
        %v1831 = vsel %vm812, %v1818, 0
        %v1834 = vsel %vm812, %v1819, 0
        %v1837 = vsel %vm812, %v1820, 0
        %1839 = vmatpush.bf16.msra.mxu0 0
        %1840 = vmatpush.bf16.msra.mxu0 0
        %1841 = vmatpush.bf16.msra.mxu0 0
        %1842 = vmatpush.bf16.msra.mxu0 0
        %1843 = vmatpush.bf16.msra.mxu0 0
        %1844 = vmatpush.bf16.msra.mxu0 0
        %1845 = vmatpush.bf16.msra.mxu0 %v1826
        %1846 = vmatpush.bf16.msra.mxu0 %v1825
        %1847 = vmatmul.bf16.gmra.mxu0 %v1828
        %v1848 = vpop.f32.mrf.mxu0
        %v1849 = vadd.f32 0.0, %v1848
        %v1850 = vpop.f32.mrf.mxu0
        %v1851 = vadd.f32 0.0, %v1850
        %1852 = vmatmul.bf16.gmra.mxu0 %v1831
        %v1853 = vpop.f32.mrf.mxu0
        %v1854 = vadd.f32 0.0, %v1853
        %v1855 = vpop.f32.mrf.mxu0
        %v1856 = vadd.f32 0.0, %v1855
        %1857 = vmatmul.bf16.gmra.mxu0 %v1834
        %v1858 = vpop.f32.mrf.mxu0
        %v1859 = vadd.f32 0.0, %v1858
        %v1860 = vpop.f32.mrf.mxu0
        %v1861 = vadd.f32 0.0, %v1860
        %1862 = vmatmul.bf16.gmra.mxu0 %v1837
        %v1863 = vpop.f32.mrf.mxu0
        %v1864 = vadd.f32 0.0, %v1863
        %v1865 = vpop.f32.mrf.mxu0
        %v1866 = vadd.f32 0.0, %v1865
        %1867 = vdwg.mxu0
        %v1868 = vadd.f32 %v1798, %v1849
        %v1869 = vadd.f32 %v1800, %v1851
        %v1870 = vadd.f32 %v1803, %v1854
        %v1871 = vadd.f32 %v1805, %v1856
        %v1872 = vadd.f32 %v1808, %v1859
        %v1873 = vadd.f32 %v1810, %v1861
        %v1874 = vadd.f32 %v1813, %v1864
        %v1875 = vadd.f32 %v1815, %v1866
        %v1876 = vpack.c.bf16 %v1698, %v1696
        %v1877 = vpack.c.bf16 %v1703, %v1701
        %v1878 = vpack.c.bf16 %v1708, %v1706
        %v1879 = vpack.c.bf16 %v1713, %v1711
        %v1880 = vld [vmem:[#allocation13 + $0x60] sm:$0xff]
        %v1881 = vld [vmem:[#allocation13 + $0x68] sm:$0xff]
        %v1882 = vld [vmem:[#allocation13 + $0x70] sm:$0xff]
        %v1883 = vld [vmem:[#allocation13 + $0x78] sm:$0xff]
        %v1884 = vpack.c.bf16 %v1881, %v1880
        %v1885 = vpack.c.bf16 %v1883, %v1882
        %v1887 = vsel %vm812, %v1876, 0
        %v1890 = vsel %vm812, %v1877, 0
        %v1893 = vsel %vm812, %v1878, 0
        %v1896 = vsel %vm812, %v1879, 0
        %1898 = vmatpush.bf16.msra.mxu0 0
        %1899 = vmatpush.bf16.msra.mxu0 0
        %1900 = vmatpush.bf16.msra.mxu0 0
        %1901 = vmatpush.bf16.msra.mxu0 0
        %1902 = vmatpush.bf16.msra.mxu0 0
        %1903 = vmatpush.bf16.msra.mxu0 0
        %1904 = vmatpush.bf16.msra.mxu0 %v1885
        %1905 = vmatpush.bf16.msra.mxu0 %v1884
        %1906 = vmatmul.bf16.gmra.mxu0 %v1887
        %v1907 = vpop.f32.mrf.mxu0
        %v1908 = vadd.f32 0.0, %v1907
        %v1909 = vpop.f32.mrf.mxu0
        %v1910 = vadd.f32 0.0, %v1909
        %1911 = vmatmul.bf16.gmra.mxu0 %v1890
        %v1912 = vpop.f32.mrf.mxu0
        %v1913 = vadd.f32 0.0, %v1912
        %v1914 = vpop.f32.mrf.mxu0
        %v1915 = vadd.f32 0.0, %v1914
        %1916 = vmatmul.bf16.gmra.mxu0 %v1893
        %v1917 = vpop.f32.mrf.mxu0
        %v1918 = vadd.f32 0.0, %v1917
        %v1919 = vpop.f32.mrf.mxu0
        %v1920 = vadd.f32 0.0, %v1919
        %1921 = vmatmul.bf16.gmra.mxu0 %v1896
        %v1922 = vpop.f32.mrf.mxu0
        %v1923 = vadd.f32 0.0, %v1922
        %v1924 = vpop.f32.mrf.mxu0
        %v1925 = vadd.f32 0.0, %v1924
        %1926 = vdwg.mxu0
        %v1927 = vadd.f32 %v1868, %v1908
        %v1928 = vadd.f32 %v1869, %v1910
        %v1929 = vadd.f32 %v1870, %v1913
        %v1930 = vadd.f32 %v1871, %v1915
        %v1931 = vadd.f32 %v1872, %v1918
        %v1932 = vadd.f32 %v1873, %v1920
        %v1933 = vadd.f32 %v1874, %v1923
        %v1934 = vadd.f32 %v1875, %v1925
        %v1935 = vld [vmem:[%s7] sm:$0x1]
        %v1937 = vperm.slane %v1935, 0
        %v1939 = vadd.f32 %v1927, %v1937
        %v1940 = vadd.f32 %v1928, %v1937
        %v1941 = vadd.f32 %v1929, %v1937
        %v1942 = vadd.f32 %v1930, %v1937
        %v1943 = vadd.f32 %v1931, %v1937
        %v1944 = vadd.f32 %v1932, %v1937
        %v1945 = vadd.f32 %v1933, %v1937
        %v1946 = vadd.f32 %v1934, %v1937
        %1947 = vst [vmem:[%s490] sm:$0xff] %v1939
        %1948 = vst [vmem:[%s490 + $0x8] sm:$0xff] %v1940
        %1949 = vst [vmem:[%s490 + $0x10] sm:$0xff] %v1941
        %1950 = vst [vmem:[%s490 + $0x18] sm:$0xff] %v1942
        %1951 = vst [vmem:[%s490 + $0x20] sm:$0xff] %v1943
        %1952 = vst [vmem:[%s490 + $0x28] sm:$0xff] %v1944
        %1953 = vst [vmem:[%s490 + $0x30] sm:$0xff] %v1945
        %1954 = vst [vmem:[%s490 + $0x38] sm:$0xff] %v1946
        %s1955 = sand.u32 %s237, 1
        %s1956 = scalar_lea.sflag [#allocation4], %s1955
        %s1957 = sand.u32 %s237, 1
        %s1958 = smul.addr %s1957, 64
        %s1959 = scalar_lea.vmem [#allocation14], %s1958
        // Predicated region
        $region81: #{tpu_custom_call.1} parent=51 // pred_check
          %p1960 = pneg %p247
        $region82: #{tpu_custom_call.1} parent=51 // pred_check_branch
          %1962 = sbr.rel (%p1960) target = $region84
        $region83: #{tpu_custom_call.1} parent=51 // pred_region
          %s1963 = smul.u32 8, %s35
          %1965 = vsyncadd %s1956, 0
          %s1966 = smul.addr %s34, 16
          %s1967 = sadd.s32 %s1963, %s1966
          %s1968 = smul.addr %s1967, 8
          %s1969 = scalar_lea.hbm %s8, %s1968
          %s1970 = sshll.u32 %s1959, 4
          %s1971 = int_to_ptr.vmem [resolvable:$true] %s1970
          %s1972 = sshll.u32 %s1969, 4
          %s1973 = int_to_ptr.hbm [resolvable:$true] %s1972
          %1978 = dma.vmem_to_hbm [thread:$0]  %s1971, 1024, %s1973, %s1956, 128, 128, 8
        $region84: #{tpu_custom_call.1} parent=51 // pred_fallthru
          _
      $region52: #{tpu_custom_call.1} parent=5 // pred_fallthru
        _
      %p1979 = scmp.le.s32.totalorder 2, %s25
      // Predicated region
      $region85: #{tpu_custom_call.1} parent=5 // pred_check
        %p1980 = pneg %p1979
      $region86: #{tpu_custom_call.1} parent=5 // pred_check_branch
        %1982 = sbr.rel (%p1980) target = $region88
      $region87: #{tpu_custom_call.1} parent=5 // pred_region
        %s1983 = ssub.s32 %s25, 2
        // Predicated region
        $region89: #{tpu_custom_call.1} parent=87 // pred_check
          %p1984 = pneg %p253
        $region90: #{tpu_custom_call.1} parent=87 // pred_check_branch
          %1986 = sbr.rel (%p1984) target = $region92
        $region91: #{tpu_custom_call.1} parent=87 // pred_region
          %s1987 = sand.u32 %s238, 1
          %s1988 = scalar_lea.sflag [#allocation4], %s1987
          %s1989 = sand.u32 %s238, 1
          %s1990 = smul.addr %s1989, 64
          %s1991 = scalar_lea.vmem [#allocation14], %s1990
          %1993 = dma.done %s1988, 1024
        $region92: #{tpu_custom_call.1} parent=87 // pred_fallthru
          _
      $region88: #{tpu_custom_call.1} parent=5 // pred_fallthru
        _
    $region6: #{tpu_custom_call.1} parent=1 // loop_footer
      %s29 = sadd.s32 1, %s25
    $region7: #{tpu_custom_call.1} parent=1 // loop_footer_branch
      %24 = sbr.rel target = $region3
    $region8: #{tpu_custom_call.1} parent=1 // loop_exit
      _
    %1994 = vsyncpa [#allocation3], 1
    %s1995 = scalar_lea.sflag [#allocation3], 1
    %1996 = vsyncpa %s1995, 1
    %1997 = vsyncpa [#allocation6], 1
    %s1998 = scalar_lea.sflag [#allocation6], 1
    %1999 = vsyncpa %s1998, 1
    %2000 = vsyncpa [#allocation9], 1
    %2001 = vsyncpa [#allocation12], 1
    %2002 = vsyncpa [#allocation4], 1
    %s2003 = scalar_lea.sflag [#allocation4], 1
    %2004 = vsyncpa %s2003, 1

</llo_original>
